<compile_context>
chip_gen: v6e
topology: v6e:2x2x1
jax: 0.10.0
libtpu: 0.0.40
codegen_flags: <defaults>
</compile_context>

<pallas_src>
import jax
import jax.numpy as jnp
from jax.experimental import pallas as pl
from jax.experimental.pallas import tpu as pltpu

D_IN, H1, H2, D_OUT = 2, 10, 10, 1
HP = 16          # hidden dims padded to a sublane multiple (zeros in the pad rows/cols)
_TM_INNER = 512  # lanes per in-kernel sub-tile (bounds vreg pressure)


def _mlp_kernel(w1_ref, b1_ref, w2_ref, b2_ref, w3_ref, b3_ref, x_ref, o_ref):
    # Weights are tiny and VMEM-resident; hoist them into vregs once per grid step.
    w1 = w1_ref[...]   # [HP, D_IN]
    b1 = b1_ref[...]   # [HP, 1]
    w2 = w2_ref[...]   # [HP, HP]
    b2 = b2_ref[...]   # [HP, 1]
    w3 = w3_ref[...]   # [HP, 1]   (third layer weights as a column)
    b3 = b3_ref[...]   # [1, 1]

    tm = x_ref.shape[-1]
    for t in range(tm // _TM_INNER):           # static trip count; sub-tiles are independent
        lo = t * _TM_INNER
        hi = lo + _TM_INNER
        xs = x_ref[:, lo:hi]                   # [D_IN, 512], lane-dense

        # Layer 1 (fan-in 2): VPU outer-product broadcast FMAs on full [HP, 512] tiles.
        h1 = b1
        for i in range(D_IN):
            h1 = h1 + w1[:, i:i + 1] * xs[i:i + 1, :]
        h1 = jnp.maximum(h1, 0.0)              # [HP, 512]

        # Layer 2 (10x10, padded 16x16): MXU matmul, f32-accurate via HIGHEST precision.
        h2 = jnp.dot(w2, h1,
                     preferred_element_type=jnp.float32,
                     precision=jax.lax.Precision.HIGHEST)
        h2 = jnp.maximum(h2 + b2, 0.0)         # [HP, 512]

        # Layer 3 (fan-out 1): weighted cross-sublane reduce -> [1, 512] lane-dense store.
        o_ref[:, lo:hi] = jnp.sum(w3 * h2, axis=0, keepdims=True) + b3


def _pack_params(params):
    """Pad PyTorch-shaped Linear params ([out, in] weights) to sublane-aligned tiles."""
    (w1, b1), (w2, b2), (w3, b3) = params
    f32 = jnp.float32
    w1p = jnp.zeros((HP, D_IN), f32).at[:H1, :].set(w1.astype(f32))
    b1p = jnp.zeros((HP, 1), f32).at[:H1, 0].set(b1.astype(f32))
    w2p = jnp.zeros((HP, HP), f32).at[:H2, :H1].set(w2.astype(f32))
    b2p = jnp.zeros((HP, 1), f32).at[:H2, 0].set(b2.astype(f32))
    w3p = jnp.zeros((HP, 1), f32).at[:H2, 0].set(w3.astype(f32)[0, :])
    b3p = b3.astype(f32).reshape(1, 1)
    return w1p, b1p, w2p, b2p, w3p, b3p


def circle_model_v2_feature_major(xt, params, *, block_n=4096):
    """Feature-major entry point (no transposes): xt [2, N] f32 -> [1, N] f32."""
    w1p, b1p, w2p, b2p, w3p, b3p = _pack_params(params)
    n = xt.shape[1]

    # Batch tile: large to amortize per-step overhead, but never (much) larger than N,
    # and always a multiple of the in-kernel sub-tile / 128-lane granule.
    bn = max(1024, min(int(block_n), pl.cdiv(n, 1024) * 1024))
    bn = pl.cdiv(bn, _TM_INNER) * _TM_INNER
    n_pad = pl.cdiv(n, bn) * bn
    if n_pad != n:
        xt = jnp.pad(xt, ((0, 0), (0, n_pad - n)))

    const = lambda i: (0, 0)  # resident weight blocks (block == full array)
    out = pl.pallas_call(
        _mlp_kernel,
        out_shape=jax.ShapeDtypeStruct((D_OUT, n_pad), jnp.float32),
        grid_spec=pltpu.PrefetchScalarGridSpec(
            num_scalar_prefetch=0,
            grid=(n_pad // bn,),
            in_specs=[
                pl.BlockSpec((HP, D_IN), const),
                pl.BlockSpec((HP, 1), const),
                pl.BlockSpec((HP, HP), const),
                pl.BlockSpec((HP, 1), const),
                pl.BlockSpec((HP, 1), const),
                pl.BlockSpec((1, 1), const),
                pl.BlockSpec((D_IN, bn), lambda i: (0, i)),   # batch on lanes
            ],
            out_specs=pl.BlockSpec((D_OUT, bn), lambda i: (0, i)),
        ),
        compiler_params=pltpu.CompilerParams(
            dimension_semantics=("parallel",)),
        cost_estimate=pl.CostEstimate(
            flops=2 * (D_IN * H1 + H1 * H2 + H2 * D_OUT) * n_pad,
            transcendentals=0,
            bytes_accessed=(D_IN + D_OUT) * 4 * n_pad),
    )(w1p, b1p, w2p, b2p, w3p, b3p, xt)
    return out[:, :n]


def circle_model_v2(x, params, *, block_n=4096):
    """PyTorch-layout wrapper: x [N, 2] f32 -> [N, 1] f32.

    The single x transpose below is the only extra HBM copy; callers that can produce
    feature-major data should use circle_model_v2_feature_major directly to avoid it.
    """
    xt = x.astype(jnp.float32).T            # [2, N]
    out = circle_model_v2_feature_major(xt, params, block_n=block_n)
    return out.T                            # [1, N] -> [N, 1] (layout-free)


def init_params(key):
    """Deterministic init matching PyTorch nn.Linear shapes ([out, in] weights)."""
    ks = jax.random.split(key, 6)

    def linear(kw, kb, fan_in, fan_out):
        bound = 1.0 / jnp.sqrt(fan_in)
        w = jax.random.uniform(kw, (fan_out, fan_in), jnp.float32, -bound, bound)
        b = jax.random.uniform(kb, (fan_out,), jnp.float32, -bound, bound)
        return w, b

    return (
        linear(ks[0], ks[1], D_IN, H1),
        linear(ks[2], ks[3], H1, H2),
        linear(ks[4], ks[5], H2, D_OUT),
    )


def _reference(x, params):
    (w1, b1), (w2, b2), (w3, b3) = params
    mm = lambda a, b: jnp.matmul(a, b, precision=jax.lax.Precision.HIGHEST)
    h1 = jnp.maximum(mm(x, w1.T) + b1, 0.0)
    h2 = jnp.maximum(mm(h1, w2.T) + b2, 0.0)
    return mm(h2, w3.T) + b3


if __name__ == "__main__":
    key = jax.random.PRNGKey(0)
    k_x, k_p = jax.random.split(key)
    N = 16
    x = jax.random.normal(k_x, (N, D_IN), jnp.float32)
    params = init_params(k_p)

    out = circle_model_v2(x, params)
    jax.block_until_ready(out)

    ref = _reference(x, params)
    assert out.shape == (N, D_OUT), out.shape
    assert jnp.allclose(out, ref, atol=1e-5, rtol=1e-5), float(jnp.max(jnp.abs(out - ref)))
    print("KERNEL_OK")
</pallas_src>

<mosaic_0001>
module attributes {stable_mosaic.version = 11 : i64} {
  func.func @_mlp_kernel(%arg0: i32, %arg1: memref<16x2xf32, #tpu.memory_space<vmem>>, %arg2: memref<16x1xf32, #tpu.memory_space<vmem>>, %arg3: memref<16x16xf32, #tpu.memory_space<vmem>>, %arg4: memref<16x1xf32, #tpu.memory_space<vmem>>, %arg5: memref<16x1xf32, #tpu.memory_space<vmem>>, %arg6: memref<1x1xf32, #tpu.memory_space<vmem>>, %arg7: memref<2x1024xf32, #tpu.memory_space<vmem>>, %arg8: memref<1x1024xf32, #tpu.memory_space<vmem>>) attributes {dimension_semantics = [#tpu.dimension_semantics<parallel>], iteration_bounds = array<i64: 1>, scalar_prefetch = 0 : i64, scratch_operands = 0 : i64, tpu.core_type = #tpu.core_type<tc>, window_params = [{pipeline_mode = #tpu.pipeline_mode<synchronous>, transform_indices = @transform_0, window_bounds = array<i64: 16, 2>}, {pipeline_mode = #tpu.pipeline_mode<synchronous>, transform_indices = @transform_1, window_bounds = array<i64: 16, 1>}, {pipeline_mode = #tpu.pipeline_mode<synchronous>, transform_indices = @transform_2, window_bounds = array<i64: 16, 16>}, {pipeline_mode = #tpu.pipeline_mode<synchronous>, transform_indices = @transform_3, window_bounds = array<i64: 16, 1>}, {pipeline_mode = #tpu.pipeline_mode<synchronous>, transform_indices = @transform_4, window_bounds = array<i64: 16, 1>}, {pipeline_mode = #tpu.pipeline_mode<synchronous>, transform_indices = @transform_5, window_bounds = array<i64: 1, 1>}, {transform_indices = @transform_6, window_bounds = array<i64: 2, 1024>}, {transform_indices = @transform_7, window_bounds = array<i64: 1, 1024>}]} {
    %c0 = arith.constant 0 : index
    %c0_0 = arith.constant 0 : index
    %0 = vector.load %arg1[%c0, %c0_0] : memref<16x2xf32, #tpu.memory_space<vmem>>, vector<16x2xf32>
    %c0_1 = arith.constant 0 : index
    %c0_2 = arith.constant 0 : index
    %1 = vector.load %arg2[%c0_1, %c0_2] : memref<16x1xf32, #tpu.memory_space<vmem>>, vector<16x1xf32>
    %c0_3 = arith.constant 0 : index
    %c0_4 = arith.constant 0 : index
    %2 = vector.load %arg3[%c0_3, %c0_4] : memref<16x16xf32, #tpu.memory_space<vmem>>, vector<16x16xf32>
    %c0_5 = arith.constant 0 : index
    %c0_6 = arith.constant 0 : index
    %3 = vector.load %arg4[%c0_5, %c0_6] : memref<16x1xf32, #tpu.memory_space<vmem>>, vector<16x1xf32>
    %c0_7 = arith.constant 0 : index
    %c0_8 = arith.constant 0 : index
    %4 = vector.load %arg5[%c0_7, %c0_8] : memref<16x1xf32, #tpu.memory_space<vmem>>, vector<16x1xf32>
    %c0_9 = arith.constant 0 : index
    %c0_10 = arith.constant 0 : index
    %5 = vector.load %arg6[%c0_9, %c0_10] : memref<1x1xf32, #tpu.memory_space<vmem>>, vector<1x1xf32>
    %c0_11 = arith.constant 0 : index
    %c0_12 = arith.constant 0 : index
    %6 = vector.load %arg7[%c0_11, %c0_12] : memref<2x1024xf32, #tpu.memory_space<vmem>>, vector<2x512xf32>
    %7 = vector.extract_strided_slice %0 {offsets = [0, 0], sizes = [16, 1], strides = [1, 1]} : vector<16x2xf32> to vector<16x1xf32>
    %8 = vector.extract_strided_slice %6 {offsets = [0, 0], sizes = [1, 512], strides = [1, 1]} : vector<2x512xf32> to vector<1x512xf32>
    %9 = vector.broadcast %7 : vector<16x1xf32> to vector<16x512xf32>
    %10 = vector.broadcast %8 : vector<1x512xf32> to vector<16x512xf32>
    %11 = arith.mulf %9, %10 : vector<16x512xf32>
    %12 = vector.broadcast %1 : vector<16x1xf32> to vector<16x512xf32>
    %13 = arith.addf %12, %11 : vector<16x512xf32>
    %14 = vector.extract_strided_slice %0 {offsets = [0, 1], sizes = [16, 1], strides = [1, 1]} : vector<16x2xf32> to vector<16x1xf32>
    %15 = vector.extract_strided_slice %6 {offsets = [1, 0], sizes = [1, 512], strides = [1, 1]} : vector<2x512xf32> to vector<1x512xf32>
    %16 = vector.broadcast %14 : vector<16x1xf32> to vector<16x512xf32>
    %17 = vector.broadcast %15 : vector<1x512xf32> to vector<16x512xf32>
    %18 = arith.mulf %16, %17 : vector<16x512xf32>
    %19 = arith.addf %13, %18 : vector<16x512xf32>
    %cst = arith.constant 0.000000e+00 : f32
    %20 = vector.broadcast %cst : f32 to vector<16x512xf32>
    %21 = arith.maximumf %19, %20 : vector<16x512xf32>
    %cst_13 = arith.constant dense<0.000000e+00> : vector<16x512xf32>
    %22 = tpu.matmul %2, %21, %cst_13 {dimension_numbers = #tpu.dot_dimension_numbers<[1], [0], [0], [1], [0, 0, 1, 1], [], []>, precision = #tpu.contract_precision<fp32>} : vector<16x16xf32>, vector<16x512xf32>, vector<16x512xf32> -> vector<16x512xf32>
    %23 = vector.broadcast %3 : vector<16x1xf32> to vector<16x512xf32>
    %24 = arith.addf %22, %23 : vector<16x512xf32>
    %cst_14 = arith.constant 0.000000e+00 : f32
    %25 = vector.broadcast %cst_14 : f32 to vector<16x512xf32>
    %26 = arith.maximumf %24, %25 : vector<16x512xf32>
    %27 = vector.broadcast %4 : vector<16x1xf32> to vector<16x512xf32>
    %28 = arith.mulf %27, %26 : vector<16x512xf32>
    %cst_15 = arith.constant dense<0.000000e+00> : vector<512xf32>
    %29 = vector.multi_reduction <add>, %28, %cst_15 [0] : vector<16x512xf32> to vector<512xf32>
    %30 = vector.shape_cast %29 : vector<512xf32> to vector<1x512xf32>
    %31 = vector.broadcast %5 : vector<1x1xf32> to vector<1x512xf32>
    %32 = arith.addf %30, %31 : vector<1x512xf32>
    %c0_16 = arith.constant 0 : index
    %c0_17 = arith.constant 0 : index
    %33 = vector.load %arg8[%c0_16, %c0_17] : memref<1x1024xf32, #tpu.memory_space<vmem>>, vector<1x512xf32>
    tpu.vector_store %arg8[%c0_16, %c0_17], %32 {strides = array<i32>} : memref<1x1024xf32, #tpu.memory_space<vmem>>, vector<1x512xf32>,
    %c0_18 = arith.constant 0 : index
    %c512 = arith.constant 512 : index
    %34 = vector.load %arg7[%c0_18, %c512] : memref<2x1024xf32, #tpu.memory_space<vmem>>, vector<2x512xf32>
    %35 = vector.extract_strided_slice %0 {offsets = [0, 0], sizes = [16, 1], strides = [1, 1]} : vector<16x2xf32> to vector<16x1xf32>
    %36 = vector.extract_strided_slice %34 {offsets = [0, 0], sizes = [1, 512], strides = [1, 1]} : vector<2x512xf32> to vector<1x512xf32>
    %37 = vector.broadcast %35 : vector<16x1xf32> to vector<16x512xf32>
    %38 = vector.broadcast %36 : vector<1x512xf32> to vector<16x512xf32>
    %39 = arith.mulf %37, %38 : vector<16x512xf32>
    %40 = vector.broadcast %1 : vector<16x1xf32> to vector<16x512xf32>
    %41 = arith.addf %40, %39 : vector<16x512xf32>
    %42 = vector.extract_strided_slice %0 {offsets = [0, 1], sizes = [16, 1], strides = [1, 1]} : vector<16x2xf32> to vector<16x1xf32>
    %43 = vector.extract_strided_slice %34 {offsets = [1, 0], sizes = [1, 512], strides = [1, 1]} : vector<2x512xf32> to vector<1x512xf32>
    %44 = vector.broadcast %42 : vector<16x1xf32> to vector<16x512xf32>
    %45 = vector.broadcast %43 : vector<1x512xf32> to vector<16x512xf32>
    %46 = arith.mulf %44, %45 : vector<16x512xf32>
    %47 = arith.addf %41, %46 : vector<16x512xf32>
    %cst_19 = arith.constant 0.000000e+00 : f32
    %48 = vector.broadcast %cst_19 : f32 to vector<16x512xf32>
    %49 = arith.maximumf %47, %48 : vector<16x512xf32>
    %cst_20 = arith.constant dense<0.000000e+00> : vector<16x512xf32>
    %50 = tpu.matmul %2, %49, %cst_20 {dimension_numbers = #tpu.dot_dimension_numbers<[1], [0], [0], [1], [0, 0, 1, 1], [], []>, precision = #tpu.contract_precision<fp32>} : vector<16x16xf32>, vector<16x512xf32>, vector<16x512xf32> -> vector<16x512xf32>
    %51 = vector.broadcast %3 : vector<16x1xf32> to vector<16x512xf32>
    %52 = arith.addf %50, %51 : vector<16x512xf32>
    %cst_21 = arith.constant 0.000000e+00 : f32
    %53 = vector.broadcast %cst_21 : f32 to vector<16x512xf32>
    %54 = arith.maximumf %52, %53 : vector<16x512xf32>
    %55 = vector.broadcast %4 : vector<16x1xf32> to vector<16x512xf32>
    %56 = arith.mulf %55, %54 : vector<16x512xf32>
    %cst_22 = arith.constant dense<0.000000e+00> : vector<512xf32>
    %57 = vector.multi_reduction <add>, %56, %cst_22 [0] : vector<16x512xf32> to vector<512xf32>
    %58 = vector.shape_cast %57 : vector<512xf32> to vector<1x512xf32>
    %59 = vector.broadcast %5 : vector<1x1xf32> to vector<1x512xf32>
    %60 = arith.addf %58, %59 : vector<1x512xf32>
    %c0_23 = arith.constant 0 : index
    %c512_24 = arith.constant 512 : index
    %61 = vector.load %arg8[%c0_23, %c512_24] : memref<1x1024xf32, #tpu.memory_space<vmem>>, vector<1x512xf32>
    tpu.vector_store %arg8[%c0_23, %c512_24], %60 {strides = array<i32>} : memref<1x1024xf32, #tpu.memory_space<vmem>>, vector<1x512xf32>,
    return
  }
  func.func @transform_0(%arg0: i32) -> (i32, i32) {
    %c0_i32 = arith.constant 0 : i32
    %c0_i32_0 = arith.constant 0 : i32
    %c0_i32_1 = arith.constant 0 : i32
    return %c0_i32, %c0_i32_0 : i32, i32
  }
  func.func @transform_1(%arg0: i32) -> (i32, i32) {
    %c0_i32 = arith.constant 0 : i32
    %c0_i32_0 = arith.constant 0 : i32
    %c0_i32_1 = arith.constant 0 : i32
    return %c0_i32, %c0_i32_0 : i32, i32
  }
  func.func @transform_2(%arg0: i32) -> (i32, i32) {
    %c0_i32 = arith.constant 0 : i32
    %c0_i32_0 = arith.constant 0 : i32
    %c0_i32_1 = arith.constant 0 : i32
    return %c0_i32, %c0_i32_0 : i32, i32
  }
  func.func @transform_3(%arg0: i32) -> (i32, i32) {
    %c0_i32 = arith.constant 0 : i32
    %c0_i32_0 = arith.constant 0 : i32
    %c0_i32_1 = arith.constant 0 : i32
    return %c0_i32, %c0_i32_0 : i32, i32
  }
  func.func @transform_4(%arg0: i32) -> (i32, i32) {
    %c0_i32 = arith.constant 0 : i32
    %c0_i32_0 = arith.constant 0 : i32
    %c0_i32_1 = arith.constant 0 : i32
    return %c0_i32, %c0_i32_0 : i32, i32
  }
  func.func @transform_5(%arg0: i32) -> (i32, i32) {
    %c0_i32 = arith.constant 0 : i32
    %c0_i32_0 = arith.constant 0 : i32
    %c0_i32_1 = arith.constant 0 : i32
    return %c0_i32, %c0_i32_0 : i32, i32
  }
  func.func @transform_6(%arg0: i32) -> (i32, i32) {
    %c0_i32 = arith.constant 0 : i32
    %c0_i32_0 = arith.constant 0 : i32
    return %c0_i32, %arg0 : i32, i32
  }
  func.func @transform_7(%arg0: i32) -> (i32, i32) {
    %c0_i32 = arith.constant 0 : i32
    %c0_i32_0 = arith.constant 0 : i32
    return %c0_i32, %arg0 : i32, i32
  }
}

</mosaic_0001>

<llo_original>
// kernel: tpu_custom_call.1
$region0: #{tpu_custom_call.1}
  #allocation0 [shape = 'u32[]', space=smem, size = 0x4, offset = 0x4, fixed_abs, tag = 'smem constant byte address 0x4 - core index']
  #allocation1 [shape = 'u32[144,128]{1,0:T(1,128)}', space=vmem, size = 0x12000, scoped, tag = 'internal scratch']
  #allocation2 [shape = 'f32[1,1]{1,0:T(1,128)S(1)}', space=vmem, size = 0x200, scoped, tag = 'scoped memory for tpu_custom_call.1']
  %s0 = inlined_call_operand.vmem [shape: f32[16,2], index: 0, kind: input, shape index: {}]
  %s1 = inlined_call_operand.vmem [shape: f32[16,1], index: 1, kind: input, shape index: {}]
  %s2 = inlined_call_operand.vmem [shape: f32[16,16], index: 2, kind: input, shape index: {}]
  %s3 = inlined_call_operand.vmem [shape: f32[16,1], index: 3, kind: input, shape index: {}]
  %s4 = inlined_call_operand.vmem [shape: f32[16,1], index: 4, kind: input, shape index: {}]
  %s5 = inlined_call_operand.<no memory space> [shape: f32[1,1], index: 5, kind: input, shape index: {}]
  %s6 = inlined_call_operand.vmem [shape: f32[2,1024], index: 6, kind: input, shape index: {}]
  %s7 = inlined_call_operand.hbm [shape: f32[1,1024], index: 7, kind: output, shape index: {}]
  %s8 = sld [smem:[#allocation0]]
  $region38: #{tpu_custom_call.1} parent=0
    _
  %s10 = ssub.s32 1, %s8
  %s11 = scalar_select 0, %s10, %s8
  %v12 = vstv %s5
  %13 = vst [vmem:[#allocation2] sm:$0x1] %v12
  $region1: #{tpu_custom_call.1} parent=0
    #allocation3 [shape = 'u8[4096]{0}', space=vmem, size = 0x1000, scoped, tag = 'output window, operand 0, single buffered']
    #allocation4 [shape = 's32[1]{0}', space=sflag, size = 0x4, scoped, tag = 'scoped memory for tpu_custom_call.1']
    %14 = vsyncpa [#allocation4], 0
    // Predicated region
    $region2: #{tpu_custom_call.1} parent=1 // pred_check
      _
    $region3: #{tpu_custom_call.1} parent=1 // pred_check_branch
      %16 = sbr.rel (0) target = $region5
    $region4: #{tpu_custom_call.1} parent=1 // pred_region
      _
    $region5: #{tpu_custom_call.1} parent=1 // pred_fallthru
      _
    // Predicated region
    $region6: #{tpu_custom_call.1} parent=1 // pred_check
      _
    $region7: #{tpu_custom_call.1} parent=1 // pred_check_branch
      %18 = sbr.rel (0) target = $region9
    $region8: #{tpu_custom_call.1} parent=1 // pred_region
      _
    $region9: #{tpu_custom_call.1} parent=1 // pred_fallthru
      _
    // Predicated region
    $region10: #{tpu_custom_call.1} parent=1 // pred_check
      _
    $region11: #{tpu_custom_call.1} parent=1 // pred_check_branch
      %20 = sbr.rel (0) target = $region13
    $region12: #{tpu_custom_call.1} parent=1 // pred_region
      _
    $region13: #{tpu_custom_call.1} parent=1 // pred_fallthru
      _
    // Predicated region
    $region14: #{tpu_custom_call.1} parent=1 // pred_check
      _
    $region15: #{tpu_custom_call.1} parent=1 // pred_check_branch
      %22 = sbr.rel (0) target = $region17
    $region16: #{tpu_custom_call.1} parent=1 // pred_region
      _
    $region17: #{tpu_custom_call.1} parent=1 // pred_fallthru
      _
    // Predicated region
    $region18: #{tpu_custom_call.1} parent=1 // pred_check
      _
    $region19: #{tpu_custom_call.1} parent=1 // pred_check_branch
      %24 = sbr.rel (0) target = $region21
    $region20: #{tpu_custom_call.1} parent=1 // pred_region
      _
    $region21: #{tpu_custom_call.1} parent=1 // pred_fallthru
      _
    // Predicated region
    $region22: #{tpu_custom_call.1} parent=1 // pred_check
      _
    $region23: #{tpu_custom_call.1} parent=1 // pred_check_branch
      %26 = sbr.rel (0) target = $region25
    $region24: #{tpu_custom_call.1} parent=1 // pred_region
      _
    $region25: #{tpu_custom_call.1} parent=1 // pred_fallthru
      _
    // Predicated region
    $region26: #{tpu_custom_call.1} parent=1 // pred_check
      _
    $region27: #{tpu_custom_call.1} parent=1 // pred_check_branch
      %28 = sbr.rel (0) target = $region29
    $region28: #{tpu_custom_call.1} parent=1 // pred_region
      _
    $region29: #{tpu_custom_call.1} parent=1 // pred_fallthru
      _
    %v29 = vld [vmem:[%s0] sm:$0xff]
    %v30 = vld [vmem:[%s0 + $0x8] sm:$0xff]
    %v31 = vld [vmem:[%s1] sm:$0xff]
    %v32 = vld [vmem:[%s1 + $0x8] sm:$0xff]
    %v33 = vld [vmem:[%s2] sm:$0xff]
    %v34 = vld [vmem:[%s2 + $0x8] sm:$0xff]
    %v35 = vld [vmem:[%s3] sm:$0xff]
    %v36 = vld [vmem:[%s3 + $0x8] sm:$0xff]
    %v37 = vld [vmem:[%s4] sm:$0xff]
    %v38 = vld [vmem:[%s4 + $0x8] sm:$0xff]
    %v39 = vld [vmem:[#allocation2] sm:$0x1]
    %v40 = vld [vmem:[%s6] sm:$0xff]
    %42 = vset.pattern.permute.xlu0 0
    %43 = vperm.xlu0 %42, %v29
    %v44 = vpop.permute.xlu0 %43
    %47 = vset.pattern.permute.xlu0 0
    %48 = vperm.xlu0 %47, %v30
    %v49 = vpop.permute.xlu0 %48
    %v52 = vlaneseq
    %v53 = vshrl.u32 %v52, 7
    %v54 = vsub.s32 0, %v53
    %v55 = vrot.slane %v40, %v54
    %v56 = vlaneseq
    %v57 = vshrl.u32 %v56, 7
    %v58 = vsub.s32 2, %v57
    %v59 = vrot.slane %v40, %v58
    %v60 = vlaneseq
    %v61 = vshrl.u32 %v60, 7
    %v62 = vsub.s32 4, %v61
    %v63 = vrot.slane %v40, %v62
    %v64 = vlaneseq
    %v65 = vshrl.u32 %v64, 7
    %v66 = vsub.s32 6, %v65
    %v67 = vrot.slane %v40, %v66
    %v72 = vlaneseq
    %v73 = vshrl.u32 %v72, 7
    %v74 = vsub.s32 0, %v73
    %v75 = vrot.slane %v55, %v74
    %v76 = vlaneseq
    %v77 = vshrl.u32 %v76, 7
    %v78 = vsub.s32 0, %v77
    %v79 = vrot.slane %v59, %v78
    %v80 = vlaneseq
    %v81 = vshrl.u32 %v80, 7
    %v82 = vsub.s32 0, %v81
    %v83 = vrot.slane %v63, %v82
    %v84 = vlaneseq
    %v85 = vshrl.u32 %v84, 7
    %v86 = vsub.s32 0, %v85
    %v87 = vrot.slane %v67, %v86
    %v88 = vmul.f32 %v44, %v75
    %v89 = vmul.f32 %v44, %v79
    %v90 = vmul.f32 %v44, %v83
    %v91 = vmul.f32 %v44, %v87
    %v92 = vmul.f32 %v49, %v75
    %v93 = vmul.f32 %v49, %v79
    %v94 = vmul.f32 %v49, %v83
    %v95 = vmul.f32 %v49, %v87
    %97 = vset.pattern.permute.xlu0 0
    %98 = vperm.xlu0 %97, %v31
    %v99 = vpop.permute.xlu0 %98
    %102 = vset.pattern.permute.xlu0 0
    %103 = vperm.xlu0 %102, %v32
    %v104 = vpop.permute.xlu0 %103
    %v106 = vadd.f32 %v99, %v88
    %v107 = vadd.f32 %v99, %v89
    %v108 = vadd.f32 %v99, %v90
    %v109 = vadd.f32 %v99, %v91
    %v110 = vadd.f32 %v104, %v92
    %v111 = vadd.f32 %v104, %v93
    %v112 = vadd.f32 %v104, %v94
    %v113 = vadd.f32 %v104, %v95
    %114 = vset.pattern.permute.xlu0 1
    %115 = vperm.xlu0 %114, %v29
    %v116 = vpop.permute.xlu0 %115
    %118 = vset.pattern.permute.xlu0 1
    %119 = vperm.xlu0 %118, %v30
    %v120 = vpop.permute.xlu0 %119
    %v122 = vlaneseq
    %v123 = vshrl.u32 %v122, 7
    %v124 = vsub.s32 1, %v123
    %v125 = vrot.slane %v40, %v124
    %v126 = vlaneseq
    %v127 = vshrl.u32 %v126, 7
    %v128 = vsub.s32 3, %v127
    %v129 = vrot.slane %v40, %v128
    %v130 = vlaneseq
    %v131 = vshrl.u32 %v130, 7
    %v132 = vsub.s32 5, %v131
    %v133 = vrot.slane %v40, %v132
    %v134 = vlaneseq
    %v135 = vshrl.u32 %v134, 7
    %v136 = vsub.s32 7, %v135
    %v137 = vrot.slane %v40, %v136
    %v142 = vlaneseq
    %v143 = vshrl.u32 %v142, 7
    %v144 = vsub.s32 1, %v143
    %v145 = vrot.slane %v125, %v144
    %v146 = vlaneseq
    %v147 = vshrl.u32 %v146, 7
    %v148 = vsub.s32 1, %v147
    %v149 = vrot.slane %v129, %v148
    %v150 = vlaneseq
    %v151 = vshrl.u32 %v150, 7
    %v152 = vsub.s32 1, %v151
    %v153 = vrot.slane %v133, %v152
    %v154 = vlaneseq
    %v155 = vshrl.u32 %v154, 7
    %v156 = vsub.s32 1, %v155
    %v157 = vrot.slane %v137, %v156
    %v158 = vmul.f32 %v116, %v145
    %v159 = vmul.f32 %v116, %v149
    %v160 = vmul.f32 %v116, %v153
    %v161 = vmul.f32 %v116, %v157
    %v162 = vmul.f32 %v120, %v145
    %v163 = vmul.f32 %v120, %v149
    %v164 = vmul.f32 %v120, %v153
    %v165 = vmul.f32 %v120, %v157
    %v166 = vadd.f32 %v106, %v158
    %v167 = vadd.f32 %v107, %v159
    %v168 = vadd.f32 %v108, %v160
    %v169 = vadd.f32 %v109, %v161
    %v170 = vadd.f32 %v110, %v162
    %v171 = vadd.f32 %v111, %v163
    %v172 = vadd.f32 %v112, %v164
    %v173 = vadd.f32 %v113, %v165
    %v174 = vmax.f32 %v166, 0.0
    %v175 = vmax.f32 %v167, 0.0
    %v176 = vmax.f32 %v168, 0.0
    %v177 = vmax.f32 %v169, 0.0
    %v178 = vmax.f32 %v170, 0.0
    %v179 = vmax.f32 %v171, 0.0
    %v180 = vmax.f32 %v172, 0.0
    %v181 = vmax.f32 %v173, 0.0
    %183 = vset.pattern.permute.xlu0 0
    %184 = vperm.xlu0 %183, %v35
    %v185 = vpop.permute.xlu0 %184
    %188 = vset.pattern.permute.xlu0 0
    %189 = vperm.xlu0 %188, %v36
    %v190 = vpop.permute.xlu0 %189
    %vm192 = vcmask 130048
    %v194 = vsel %vm192, %v33, 0
    %v197 = vsel %vm192, %v34, 0
    %199 = vmatprep.subr.mxu0 0.0
    %200 = vmatpush1.msra.mxu0 0.0
    %201 = vmatprep.subr.mxu0 0.0
    %202 = vmatpush1.msra.mxu0 0.0
    %203 = vmatprep.subr.mxu0 0.0
    %204 = vmatpush1.msra.mxu0 0.0
    %205 = vmatprep.subr.mxu0 0.0
    %206 = vmatpush1.msra.mxu0 0.0
    %207 = vmatprep.subr.mxu0 0.0
    %208 = vmatpush1.msra.mxu0 0.0
    %209 = vmatprep.subr.mxu0 0.0
    %210 = vmatpush1.msra.mxu0 0.0
    %211 = vmatprep.subr.mxu0 0.0
    %212 = vmatpush1.msra.mxu0 0.0
    %213 = vmatprep.subr.mxu0 0.0
    %214 = vmatpush1.msra.mxu0 0.0
    %215 = vmatprep.subr.mxu0 0.0
    %216 = vmatpush1.msra.mxu0 0.0
    %217 = vmatprep.subr.mxu0 0.0
    %218 = vmatpush1.msra.mxu0 0.0
    %219 = vmatprep.subr.mxu0 0.0
    %220 = vmatpush1.msra.mxu0 0.0
    %221 = vmatprep.subr.mxu0 0.0
    %222 = vmatpush1.msra.mxu0 0.0
    %223 = vmatprep.subr.mxu0 0.0
    %224 = vmatpush1.msra.mxu0 0.0
    %225 = vmatprep.subr.mxu0 0.0
    %226 = vmatpush1.msra.mxu0 0.0
    %v227 = vand.u32 %v179, 4294901760
    %228 = vmatprep.subr.mxu0 %v227
    %v229 = vand.u32 %v178, 4294901760
    %230 = vmatpush1.msra.mxu0 %v229
    %v231 = vand.u32 %v175, 4294901760
    %232 = vmatprep.subr.mxu0 %v231
    %v233 = vand.u32 %v174, 4294901760
    %234 = vmatpush1.msra.mxu0 %v233
    %235 = vmatprep.subr.mxu0 0.0
    %236 = vmatpush2.msra.mxu0 0.0
    %237 = vmatprep.subr.mxu0 0.0
    %238 = vmatpush2.msra.mxu0 0.0
    %239 = vmatprep.subr.mxu0 0.0
    %240 = vmatpush2.msra.mxu0 0.0
    %241 = vmatprep.subr.mxu0 0.0
    %242 = vmatpush2.msra.mxu0 0.0
    %243 = vmatprep.subr.mxu0 0.0
    %244 = vmatpush2.msra.mxu0 0.0
    %245 = vmatprep.subr.mxu0 0.0
    %246 = vmatpush2.msra.mxu0 0.0
    %247 = vmatprep.subr.mxu0 0.0
    %248 = vmatpush2.msra.mxu0 0.0
    %249 = vmatprep.subr.mxu0 0.0
    %250 = vmatpush2.msra.mxu0 0.0
    %251 = vmatprep.subr.mxu0 0.0
    %252 = vmatpush2.msra.mxu0 0.0
    %253 = vmatprep.subr.mxu0 0.0
    %254 = vmatpush2.msra.mxu0 0.0
    %255 = vmatprep.subr.mxu0 0.0
    %256 = vmatpush2.msra.mxu0 0.0
    %257 = vmatprep.subr.mxu0 0.0
    %258 = vmatpush2.msra.mxu0 0.0
    %259 = vmatprep.subr.mxu0 0.0
    %260 = vmatpush2.msra.mxu0 0.0
    %261 = vmatprep.subr.mxu0 0.0
    %262 = vmatpush2.msra.mxu0 0.0
    %263 = vmatprep.subr.mxu0 0.0
    %264 = vmatpush2.msra.mxu0 0.0
    %265 = vmatprep.subr.mxu0 0.0
    %266 = vmatpush2.msra.mxu0 0.0
    %267 = vmatprep.mubr.f32.mxu0 0.0
    %v268 = vand.u32 %v194, 4294901760
    %v269 = vsub.f32 %v194, %v268
    %v270 = vand.u32 %v269, 4294901760
    %v271 = vsub.f32 %v269, %v270
    %v272 = vand.u32 %v271, 4294901760
    %273 = vmatmul.mubr.f32.gmra.mxu0 %v272
    %v274 = vpop.f32.mrf.mxu0
    %v275 = vadd.f32 %v185, %v274
    %v276 = vpop.f32.mrf.mxu0
    %v277 = vadd.f32 %v185, %v276
    %278 = vmatprep.mubr.f32.mxu0 0.0
    %v279 = vand.u32 %v197, 4294901760
    %v280 = vsub.f32 %v197, %v279
    %v281 = vand.u32 %v280, 4294901760
    %v282 = vsub.f32 %v280, %v281
    %v283 = vand.u32 %v282, 4294901760
    %284 = vmatmul.mubr.f32.gmra.mxu0 %v283
    %v285 = vpop.f32.mrf.mxu0
    %v286 = vadd.f32 %v190, %v285
    %v287 = vpop.f32.mrf.mxu0
    %v288 = vadd.f32 %v190, %v287
    %289 = vdwg.mxu0
    %290 = vmatprep.subr.mxu0 0.0
    %291 = vmatpush1.msra.mxu0 0.0
    %292 = vmatprep.subr.mxu0 0.0
    %293 = vmatpush1.msra.mxu0 0.0
    %294 = vmatprep.subr.mxu0 0.0
    %295 = vmatpush1.msra.mxu0 0.0
    %296 = vmatprep.subr.mxu0 0.0
    %297 = vmatpush1.msra.mxu0 0.0
    %298 = vmatprep.subr.mxu0 0.0
    %299 = vmatpush1.msra.mxu0 0.0
    %300 = vmatprep.subr.mxu0 0.0
    %301 = vmatpush1.msra.mxu0 0.0
    %302 = vmatprep.subr.mxu0 0.0
    %303 = vmatpush1.msra.mxu0 0.0
    %304 = vmatprep.subr.mxu0 0.0
    %305 = vmatpush1.msra.mxu0 0.0
    %306 = vmatprep.subr.mxu0 0.0
    %307 = vmatpush1.msra.mxu0 0.0
    %308 = vmatprep.subr.mxu0 0.0
    %309 = vmatpush1.msra.mxu0 0.0
    %310 = vmatprep.subr.mxu0 0.0
    %311 = vmatpush1.msra.mxu0 0.0
    %312 = vmatprep.subr.mxu0 0.0
    %313 = vmatpush1.msra.mxu0 0.0
    %314 = vmatprep.subr.mxu0 0.0
    %315 = vmatpush1.msra.mxu0 0.0
    %316 = vmatprep.subr.mxu0 0.0
    %317 = vmatpush1.msra.mxu0 0.0
    %v318 = vand.u32 %v179, 4294901760
    %v319 = vsub.f32 %v179, %v318
    %v320 = vand.u32 %v319, 4294901760
    %v321 = vsub.f32 %v319, %v320
    %v322 = vand.u32 %v321, 4294901760
    %323 = vmatprep.subr.mxu0 %v322
    %v324 = vand.u32 %v178, 4294901760
    %v325 = vsub.f32 %v178, %v324
    %v326 = vand.u32 %v325, 4294901760
    %v327 = vsub.f32 %v325, %v326
    %v328 = vand.u32 %v327, 4294901760
    %329 = vmatpush1.msra.mxu0 %v328
    %v330 = vand.u32 %v175, 4294901760
    %v331 = vsub.f32 %v175, %v330
    %v332 = vand.u32 %v331, 4294901760
    %v333 = vsub.f32 %v331, %v332
    %v334 = vand.u32 %v333, 4294901760
    %335 = vmatprep.subr.mxu0 %v334
    %v336 = vand.u32 %v174, 4294901760
    %v337 = vsub.f32 %v174, %v336
    %v338 = vand.u32 %v337, 4294901760
    %v339 = vsub.f32 %v337, %v338
    %v340 = vand.u32 %v339, 4294901760
    %341 = vmatpush1.msra.mxu0 %v340
    %342 = vmatprep.subr.mxu0 0.0
    %343 = vmatpush2.msra.mxu0 0.0
    %344 = vmatprep.subr.mxu0 0.0
    %345 = vmatpush2.msra.mxu0 0.0
    %346 = vmatprep.subr.mxu0 0.0
    %347 = vmatpush2.msra.mxu0 0.0
    %348 = vmatprep.subr.mxu0 0.0
    %349 = vmatpush2.msra.mxu0 0.0
    %350 = vmatprep.subr.mxu0 0.0
    %351 = vmatpush2.msra.mxu0 0.0
    %352 = vmatprep.subr.mxu0 0.0
    %353 = vmatpush2.msra.mxu0 0.0
    %354 = vmatprep.subr.mxu0 0.0
    %355 = vmatpush2.msra.mxu0 0.0
    %356 = vmatprep.subr.mxu0 0.0
    %357 = vmatpush2.msra.mxu0 0.0
    %358 = vmatprep.subr.mxu0 0.0
    %359 = vmatpush2.msra.mxu0 0.0
    %360 = vmatprep.subr.mxu0 0.0
    %361 = vmatpush2.msra.mxu0 0.0
    %362 = vmatprep.subr.mxu0 0.0
    %363 = vmatpush2.msra.mxu0 0.0
    %364 = vmatprep.subr.mxu0 0.0
    %365 = vmatpush2.msra.mxu0 0.0
    %366 = vmatprep.subr.mxu0 0.0
    %367 = vmatpush2.msra.mxu0 0.0
    %368 = vmatprep.subr.mxu0 0.0
    %369 = vmatpush2.msra.mxu0 0.0
    %370 = vmatprep.subr.mxu0 0.0
    %371 = vmatpush2.msra.mxu0 0.0
    %372 = vmatprep.subr.mxu0 0.0
    %373 = vmatpush2.msra.mxu0 0.0
    %374 = vmatprep.mubr.f32.mxu0 0.0
    %v375 = vand.u32 %v194, 4294901760
    %376 = vmatmul.mubr.f32.gmra.mxu0 %v375
    %v377 = vpop.f32.mrf.mxu0
    %v378 = vadd.f32 %v275, %v377
    %v379 = vpop.f32.mrf.mxu0
    %v380 = vadd.f32 %v277, %v379
    %381 = vmatprep.mubr.f32.mxu0 0.0
    %v382 = vand.u32 %v197, 4294901760
    %383 = vmatmul.mubr.f32.gmra.mxu0 %v382
    %v384 = vpop.f32.mrf.mxu0
    %v385 = vadd.f32 %v286, %v384
    %v386 = vpop.f32.mrf.mxu0
    %v387 = vadd.f32 %v288, %v386
    %388 = vdwg.mxu0
    %389 = vmatprep.subr.mxu0 0.0
    %390 = vmatpush1.msra.mxu0 0.0
    %391 = vmatprep.subr.mxu0 0.0
    %392 = vmatpush1.msra.mxu0 0.0
    %393 = vmatprep.subr.mxu0 0.0
    %394 = vmatpush1.msra.mxu0 0.0
    %395 = vmatprep.subr.mxu0 0.0
    %396 = vmatpush1.msra.mxu0 0.0
    %397 = vmatprep.subr.mxu0 0.0
    %398 = vmatpush1.msra.mxu0 0.0
    %399 = vmatprep.subr.mxu0 0.0
    %400 = vmatpush1.msra.mxu0 0.0
    %401 = vmatprep.subr.mxu0 0.0
    %402 = vmatpush1.msra.mxu0 0.0
    %403 = vmatprep.subr.mxu0 0.0
    %404 = vmatpush1.msra.mxu0 0.0
    %405 = vmatprep.subr.mxu0 0.0
    %406 = vmatpush1.msra.mxu0 0.0
    %407 = vmatprep.subr.mxu0 0.0
    %408 = vmatpush1.msra.mxu0 0.0
    %409 = vmatprep.subr.mxu0 0.0
    %410 = vmatpush1.msra.mxu0 0.0
    %411 = vmatprep.subr.mxu0 0.0
    %412 = vmatpush1.msra.mxu0 0.0
    %413 = vmatprep.subr.mxu0 0.0
    %414 = vmatpush1.msra.mxu0 0.0
    %415 = vmatprep.subr.mxu0 0.0
    %416 = vmatpush1.msra.mxu0 0.0
    %v417 = vand.u32 %v179, 4294901760
    %v418 = vsub.f32 %v179, %v417
    %419 = vmatprep.subr.mxu0 %v418
    %v420 = vand.u32 %v178, 4294901760
    %v421 = vsub.f32 %v178, %v420
    %422 = vmatpush1.msra.mxu0 %v421
    %v423 = vand.u32 %v175, 4294901760
    %v424 = vsub.f32 %v175, %v423
    %425 = vmatprep.subr.mxu0 %v424
    %v426 = vand.u32 %v174, 4294901760
    %v427 = vsub.f32 %v174, %v426
    %428 = vmatpush1.msra.mxu0 %v427
    %429 = vmatprep.subr.mxu0 0.0
    %430 = vmatpush2.msra.mxu0 0.0
    %431 = vmatprep.subr.mxu0 0.0
    %432 = vmatpush2.msra.mxu0 0.0
    %433 = vmatprep.subr.mxu0 0.0
    %434 = vmatpush2.msra.mxu0 0.0
    %435 = vmatprep.subr.mxu0 0.0
    %436 = vmatpush2.msra.mxu0 0.0
    %437 = vmatprep.subr.mxu0 0.0
    %438 = vmatpush2.msra.mxu0 0.0
    %439 = vmatprep.subr.mxu0 0.0
    %440 = vmatpush2.msra.mxu0 0.0
    %441 = vmatprep.subr.mxu0 0.0
    %442 = vmatpush2.msra.mxu0 0.0
    %443 = vmatprep.subr.mxu0 0.0
    %444 = vmatpush2.msra.mxu0 0.0
    %445 = vmatprep.subr.mxu0 0.0
    %446 = vmatpush2.msra.mxu0 0.0
    %447 = vmatprep.subr.mxu0 0.0
    %448 = vmatpush2.msra.mxu0 0.0
    %449 = vmatprep.subr.mxu0 0.0
    %450 = vmatpush2.msra.mxu0 0.0
    %451 = vmatprep.subr.mxu0 0.0
    %452 = vmatpush2.msra.mxu0 0.0
    %453 = vmatprep.subr.mxu0 0.0
    %454 = vmatpush2.msra.mxu0 0.0
    %455 = vmatprep.subr.mxu0 0.0
    %456 = vmatpush2.msra.mxu0 0.0
    %457 = vmatprep.subr.mxu0 0.0
    %458 = vmatpush2.msra.mxu0 0.0
    %459 = vmatprep.subr.mxu0 0.0
    %460 = vmatpush2.msra.mxu0 0.0
    %461 = vmatprep.mubr.f32.mxu0 0.0
    %v462 = vand.u32 %v194, 4294901760
    %v463 = vsub.f32 %v194, %v462
    %464 = vmatmul.mubr.f32.gmra.mxu0 %v463
    %v465 = vpop.f32.mrf.mxu0
    %v466 = vadd.f32 %v378, %v465
    %v467 = vpop.f32.mrf.mxu0
    %v468 = vadd.f32 %v380, %v467
    %469 = vmatprep.mubr.f32.mxu0 0.0
    %v470 = vand.u32 %v197, 4294901760
    %v471 = vsub.f32 %v197, %v470
    %472 = vmatmul.mubr.f32.gmra.mxu0 %v471
    %v473 = vpop.f32.mrf.mxu0
    %v474 = vadd.f32 %v385, %v473
    %v475 = vpop.f32.mrf.mxu0
    %v476 = vadd.f32 %v387, %v475
    %477 = vdwg.mxu0
    %478 = vmatprep.subr.mxu0 0.0
    %479 = vmatpush1.msra.mxu0 0.0
    %480 = vmatprep.subr.mxu0 0.0
    %481 = vmatpush1.msra.mxu0 0.0
    %482 = vmatprep.subr.mxu0 0.0
    %483 = vmatpush1.msra.mxu0 0.0
    %484 = vmatprep.subr.mxu0 0.0
    %485 = vmatpush1.msra.mxu0 0.0
    %486 = vmatprep.subr.mxu0 0.0
    %487 = vmatpush1.msra.mxu0 0.0
    %488 = vmatprep.subr.mxu0 0.0
    %489 = vmatpush1.msra.mxu0 0.0
    %490 = vmatprep.subr.mxu0 0.0
    %491 = vmatpush1.msra.mxu0 0.0
    %492 = vmatprep.subr.mxu0 0.0
    %493 = vmatpush1.msra.mxu0 0.0
    %494 = vmatprep.subr.mxu0 0.0
    %495 = vmatpush1.msra.mxu0 0.0
    %496 = vmatprep.subr.mxu0 0.0
    %497 = vmatpush1.msra.mxu0 0.0
    %498 = vmatprep.subr.mxu0 0.0
    %499 = vmatpush1.msra.mxu0 0.0
    %500 = vmatprep.subr.mxu0 0.0
    %501 = vmatpush1.msra.mxu0 0.0
    %502 = vmatprep.subr.mxu0 0.0
    %503 = vmatpush1.msra.mxu0 0.0
    %504 = vmatprep.subr.mxu0 0.0
    %505 = vmatpush1.msra.mxu0 0.0
    %v506 = vand.u32 %v179, 4294901760
    %507 = vmatprep.subr.mxu0 %v506
    %v508 = vand.u32 %v178, 4294901760
    %509 = vmatpush1.msra.mxu0 %v508
    %v510 = vand.u32 %v175, 4294901760
    %511 = vmatprep.subr.mxu0 %v510
    %v512 = vand.u32 %v174, 4294901760
    %513 = vmatpush1.msra.mxu0 %v512
    %514 = vmatprep.subr.mxu0 0.0
    %515 = vmatpush2.msra.mxu0 0.0
    %516 = vmatprep.subr.mxu0 0.0
    %517 = vmatpush2.msra.mxu0 0.0
    %518 = vmatprep.subr.mxu0 0.0
    %519 = vmatpush2.msra.mxu0 0.0
    %520 = vmatprep.subr.mxu0 0.0
    %521 = vmatpush2.msra.mxu0 0.0
    %522 = vmatprep.subr.mxu0 0.0
    %523 = vmatpush2.msra.mxu0 0.0
    %524 = vmatprep.subr.mxu0 0.0
    %525 = vmatpush2.msra.mxu0 0.0
    %526 = vmatprep.subr.mxu0 0.0
    %527 = vmatpush2.msra.mxu0 0.0
    %528 = vmatprep.subr.mxu0 0.0
    %529 = vmatpush2.msra.mxu0 0.0
    %530 = vmatprep.subr.mxu0 0.0
    %531 = vmatpush2.msra.mxu0 0.0
    %532 = vmatprep.subr.mxu0 0.0
    %533 = vmatpush2.msra.mxu0 0.0
    %534 = vmatprep.subr.mxu0 0.0
    %535 = vmatpush2.msra.mxu0 0.0
    %536 = vmatprep.subr.mxu0 0.0
    %537 = vmatpush2.msra.mxu0 0.0
    %538 = vmatprep.subr.mxu0 0.0
    %539 = vmatpush2.msra.mxu0 0.0
    %540 = vmatprep.subr.mxu0 0.0
    %541 = vmatpush2.msra.mxu0 0.0
    %542 = vmatprep.subr.mxu0 0.0
    %543 = vmatpush2.msra.mxu0 0.0
    %544 = vmatprep.subr.mxu0 0.0
    %545 = vmatpush2.msra.mxu0 0.0
    %546 = vmatprep.mubr.f32.mxu0 0.0
    %v547 = vand.u32 %v194, 4294901760
    %v548 = vsub.f32 %v194, %v547
    %v549 = vand.u32 %v548, 4294901760
    %550 = vmatmul.mubr.f32.gmra.mxu0 %v549
    %v551 = vpop.f32.mrf.mxu0
    %v552 = vadd.f32 %v466, %v551
    %v553 = vpop.f32.mrf.mxu0
    %v554 = vadd.f32 %v468, %v553
    %555 = vmatprep.mubr.f32.mxu0 0.0
    %v556 = vand.u32 %v197, 4294901760
    %v557 = vsub.f32 %v197, %v556
    %v558 = vand.u32 %v557, 4294901760
    %559 = vmatmul.mubr.f32.gmra.mxu0 %v558
    %v560 = vpop.f32.mrf.mxu0
    %v561 = vadd.f32 %v474, %v560
    %v562 = vpop.f32.mrf.mxu0
    %v563 = vadd.f32 %v476, %v562
    %564 = vdwg.mxu0
    %565 = vmatprep.subr.mxu0 0.0
    %566 = vmatpush1.msra.mxu0 0.0
    %567 = vmatprep.subr.mxu0 0.0
    %568 = vmatpush1.msra.mxu0 0.0
    %569 = vmatprep.subr.mxu0 0.0
    %570 = vmatpush1.msra.mxu0 0.0
    %571 = vmatprep.subr.mxu0 0.0
    %572 = vmatpush1.msra.mxu0 0.0
    %573 = vmatprep.subr.mxu0 0.0
    %574 = vmatpush1.msra.mxu0 0.0
    %575 = vmatprep.subr.mxu0 0.0
    %576 = vmatpush1.msra.mxu0 0.0
    %577 = vmatprep.subr.mxu0 0.0
    %578 = vmatpush1.msra.mxu0 0.0
    %579 = vmatprep.subr.mxu0 0.0
    %580 = vmatpush1.msra.mxu0 0.0
    %581 = vmatprep.subr.mxu0 0.0
    %582 = vmatpush1.msra.mxu0 0.0
    %583 = vmatprep.subr.mxu0 0.0
    %584 = vmatpush1.msra.mxu0 0.0
    %585 = vmatprep.subr.mxu0 0.0
    %586 = vmatpush1.msra.mxu0 0.0
    %587 = vmatprep.subr.mxu0 0.0
    %588 = vmatpush1.msra.mxu0 0.0
    %589 = vmatprep.subr.mxu0 0.0
    %590 = vmatpush1.msra.mxu0 0.0
    %591 = vmatprep.subr.mxu0 0.0
    %592 = vmatpush1.msra.mxu0 0.0
    %v593 = vand.u32 %v179, 4294901760
    %v594 = vsub.f32 %v179, %v593
    %v595 = vand.u32 %v594, 4294901760
    %596 = vmatprep.subr.mxu0 %v595
    %v597 = vand.u32 %v178, 4294901760
    %v598 = vsub.f32 %v178, %v597
    %v599 = vand.u32 %v598, 4294901760
    %600 = vmatpush1.msra.mxu0 %v599
    %v601 = vand.u32 %v175, 4294901760
    %v602 = vsub.f32 %v175, %v601
    %v603 = vand.u32 %v602, 4294901760
    %604 = vmatprep.subr.mxu0 %v603
    %v605 = vand.u32 %v174, 4294901760
    %v606 = vsub.f32 %v174, %v605
    %v607 = vand.u32 %v606, 4294901760
    %608 = vmatpush1.msra.mxu0 %v607
    %609 = vmatprep.subr.mxu0 0.0
    %610 = vmatpush2.msra.mxu0 0.0
    %611 = vmatprep.subr.mxu0 0.0
    %612 = vmatpush2.msra.mxu0 0.0
    %613 = vmatprep.subr.mxu0 0.0
    %614 = vmatpush2.msra.mxu0 0.0
    %615 = vmatprep.subr.mxu0 0.0
    %616 = vmatpush2.msra.mxu0 0.0
    %617 = vmatprep.subr.mxu0 0.0
    %618 = vmatpush2.msra.mxu0 0.0
    %619 = vmatprep.subr.mxu0 0.0
    %620 = vmatpush2.msra.mxu0 0.0
    %621 = vmatprep.subr.mxu0 0.0
    %622 = vmatpush2.msra.mxu0 0.0
    %623 = vmatprep.subr.mxu0 0.0
    %624 = vmatpush2.msra.mxu0 0.0
    %625 = vmatprep.subr.mxu0 0.0
    %626 = vmatpush2.msra.mxu0 0.0
    %627 = vmatprep.subr.mxu0 0.0
    %628 = vmatpush2.msra.mxu0 0.0
    %629 = vmatprep.subr.mxu0 0.0
    %630 = vmatpush2.msra.mxu0 0.0
    %631 = vmatprep.subr.mxu0 0.0
    %632 = vmatpush2.msra.mxu0 0.0
    %633 = vmatprep.subr.mxu0 0.0
    %634 = vmatpush2.msra.mxu0 0.0
    %635 = vmatprep.subr.mxu0 0.0
    %636 = vmatpush2.msra.mxu0 0.0
    %637 = vmatprep.subr.mxu0 0.0
    %638 = vmatpush2.msra.mxu0 0.0
    %639 = vmatprep.subr.mxu0 0.0
    %640 = vmatpush2.msra.mxu0 0.0
    %641 = vmatprep.mubr.f32.mxu0 0.0
    %v642 = vand.u32 %v194, 4294901760
    %643 = vmatmul.mubr.f32.gmra.mxu0 %v642
    %v644 = vpop.f32.mrf.mxu0
    %v645 = vadd.f32 %v552, %v644
    %v646 = vpop.f32.mrf.mxu0
    %v647 = vadd.f32 %v554, %v646
    %648 = vmatprep.mubr.f32.mxu0 0.0
    %v649 = vand.u32 %v197, 4294901760
    %650 = vmatmul.mubr.f32.gmra.mxu0 %v649
    %v651 = vpop.f32.mrf.mxu0
    %v652 = vadd.f32 %v561, %v651
    %v653 = vpop.f32.mrf.mxu0
    %v654 = vadd.f32 %v563, %v653
    %655 = vdwg.mxu0
    %656 = vmatprep.subr.mxu0 0.0
    %657 = vmatpush1.msra.mxu0 0.0
    %658 = vmatprep.subr.mxu0 0.0
    %659 = vmatpush1.msra.mxu0 0.0
    %660 = vmatprep.subr.mxu0 0.0
    %661 = vmatpush1.msra.mxu0 0.0
    %662 = vmatprep.subr.mxu0 0.0
    %663 = vmatpush1.msra.mxu0 0.0
    %664 = vmatprep.subr.mxu0 0.0
    %665 = vmatpush1.msra.mxu0 0.0
    %666 = vmatprep.subr.mxu0 0.0
    %667 = vmatpush1.msra.mxu0 0.0
    %668 = vmatprep.subr.mxu0 0.0
    %669 = vmatpush1.msra.mxu0 0.0
    %670 = vmatprep.subr.mxu0 0.0
    %671 = vmatpush1.msra.mxu0 0.0
    %672 = vmatprep.subr.mxu0 0.0
    %673 = vmatpush1.msra.mxu0 0.0
    %674 = vmatprep.subr.mxu0 0.0
    %675 = vmatpush1.msra.mxu0 0.0
    %676 = vmatprep.subr.mxu0 0.0
    %677 = vmatpush1.msra.mxu0 0.0
    %678 = vmatprep.subr.mxu0 0.0
    %679 = vmatpush1.msra.mxu0 0.0
    %680 = vmatprep.subr.mxu0 0.0
    %681 = vmatpush1.msra.mxu0 0.0
    %682 = vmatprep.subr.mxu0 0.0
    %683 = vmatpush1.msra.mxu0 0.0
    %v684 = vand.u32 %v179, 4294901760
    %685 = vmatprep.subr.mxu0 %v684
    %v686 = vand.u32 %v178, 4294901760
    %687 = vmatpush1.msra.mxu0 %v686
    %v688 = vand.u32 %v175, 4294901760
    %689 = vmatprep.subr.mxu0 %v688
    %v690 = vand.u32 %v174, 4294901760
    %691 = vmatpush1.msra.mxu0 %v690
    %692 = vmatprep.subr.mxu0 0.0
    %693 = vmatpush2.msra.mxu0 0.0
    %694 = vmatprep.subr.mxu0 0.0
    %695 = vmatpush2.msra.mxu0 0.0
    %696 = vmatprep.subr.mxu0 0.0
    %697 = vmatpush2.msra.mxu0 0.0
    %698 = vmatprep.subr.mxu0 0.0
    %699 = vmatpush2.msra.mxu0 0.0
    %700 = vmatprep.subr.mxu0 0.0
    %701 = vmatpush2.msra.mxu0 0.0
    %702 = vmatprep.subr.mxu0 0.0
    %703 = vmatpush2.msra.mxu0 0.0
    %704 = vmatprep.subr.mxu0 0.0
    %705 = vmatpush2.msra.mxu0 0.0
    %706 = vmatprep.subr.mxu0 0.0
    %707 = vmatpush2.msra.mxu0 0.0
    %708 = vmatprep.subr.mxu0 0.0
    %709 = vmatpush2.msra.mxu0 0.0
    %710 = vmatprep.subr.mxu0 0.0
    %711 = vmatpush2.msra.mxu0 0.0
    %712 = vmatprep.subr.mxu0 0.0
    %713 = vmatpush2.msra.mxu0 0.0
    %714 = vmatprep.subr.mxu0 0.0
    %715 = vmatpush2.msra.mxu0 0.0
    %716 = vmatprep.subr.mxu0 0.0
    %717 = vmatpush2.msra.mxu0 0.0
    %718 = vmatprep.subr.mxu0 0.0
    %719 = vmatpush2.msra.mxu0 0.0
    %720 = vmatprep.subr.mxu0 0.0
    %721 = vmatpush2.msra.mxu0 0.0
    %722 = vmatprep.subr.mxu0 0.0
    %723 = vmatpush2.msra.mxu0 0.0
    %724 = vmatprep.mubr.f32.mxu0 0.0
    %v725 = vand.u32 %v194, 4294901760
    %726 = vmatmul.mubr.f32.gmra.mxu0 %v725
    %v727 = vpop.f32.mrf.mxu0
    %v728 = vadd.f32 %v645, %v727
    %v729 = vpop.f32.mrf.mxu0
    %v730 = vadd.f32 %v647, %v729
    %731 = vmatprep.mubr.f32.mxu0 0.0
    %v732 = vand.u32 %v197, 4294901760
    %733 = vmatmul.mubr.f32.gmra.mxu0 %v732
    %v734 = vpop.f32.mrf.mxu0
    %v735 = vadd.f32 %v652, %v734
    %v736 = vpop.f32.mrf.mxu0
    %v737 = vadd.f32 %v654, %v736
    %738 = vdwg.mxu0
    %739 = vmatprep.subr.mxu0 0.0
    %740 = vmatpush1.msra.mxu0 0.0
    %741 = vmatprep.subr.mxu0 0.0
    %742 = vmatpush1.msra.mxu0 0.0
    %743 = vmatprep.subr.mxu0 0.0
    %744 = vmatpush1.msra.mxu0 0.0
    %745 = vmatprep.subr.mxu0 0.0
    %746 = vmatpush1.msra.mxu0 0.0
    %747 = vmatprep.subr.mxu0 0.0
    %748 = vmatpush1.msra.mxu0 0.0
    %749 = vmatprep.subr.mxu0 0.0
    %750 = vmatpush1.msra.mxu0 0.0
    %751 = vmatprep.subr.mxu0 0.0
    %752 = vmatpush1.msra.mxu0 0.0
    %753 = vmatprep.subr.mxu0 0.0
    %754 = vmatpush1.msra.mxu0 0.0
    %755 = vmatprep.subr.mxu0 0.0
    %756 = vmatpush1.msra.mxu0 0.0
    %757 = vmatprep.subr.mxu0 0.0
    %758 = vmatpush1.msra.mxu0 0.0
    %759 = vmatprep.subr.mxu0 0.0
    %760 = vmatpush1.msra.mxu0 0.0
    %761 = vmatprep.subr.mxu0 0.0
    %762 = vmatpush1.msra.mxu0 0.0
    %763 = vmatprep.subr.mxu0 0.0
    %764 = vmatpush1.msra.mxu0 0.0
    %765 = vmatprep.subr.mxu0 0.0
    %766 = vmatpush1.msra.mxu0 0.0
    %v767 = vand.u32 %v181, 4294901760
    %768 = vmatprep.subr.mxu0 %v767
    %v769 = vand.u32 %v180, 4294901760
    %770 = vmatpush1.msra.mxu0 %v769
    %v771 = vand.u32 %v177, 4294901760
    %772 = vmatprep.subr.mxu0 %v771
    %v773 = vand.u32 %v176, 4294901760
    %774 = vmatpush1.msra.mxu0 %v773
    %775 = vmatprep.subr.mxu0 0.0
    %776 = vmatpush2.msra.mxu0 0.0
    %777 = vmatprep.subr.mxu0 0.0
    %778 = vmatpush2.msra.mxu0 0.0
    %779 = vmatprep.subr.mxu0 0.0
    %780 = vmatpush2.msra.mxu0 0.0
    %781 = vmatprep.subr.mxu0 0.0
    %782 = vmatpush2.msra.mxu0 0.0
    %783 = vmatprep.subr.mxu0 0.0
    %784 = vmatpush2.msra.mxu0 0.0
    %785 = vmatprep.subr.mxu0 0.0
    %786 = vmatpush2.msra.mxu0 0.0
    %787 = vmatprep.subr.mxu0 0.0
    %788 = vmatpush2.msra.mxu0 0.0
    %789 = vmatprep.subr.mxu0 0.0
    %790 = vmatpush2.msra.mxu0 0.0
    %791 = vmatprep.subr.mxu0 0.0
    %792 = vmatpush2.msra.mxu0 0.0
    %793 = vmatprep.subr.mxu0 0.0
    %794 = vmatpush2.msra.mxu0 0.0
    %795 = vmatprep.subr.mxu0 0.0
    %796 = vmatpush2.msra.mxu0 0.0
    %797 = vmatprep.subr.mxu0 0.0
    %798 = vmatpush2.msra.mxu0 0.0
    %799 = vmatprep.subr.mxu0 0.0
    %800 = vmatpush2.msra.mxu0 0.0
    %801 = vmatprep.subr.mxu0 0.0
    %802 = vmatpush2.msra.mxu0 0.0
    %803 = vmatprep.subr.mxu0 0.0
    %804 = vmatpush2.msra.mxu0 0.0
    %805 = vmatprep.subr.mxu0 0.0
    %806 = vmatpush2.msra.mxu0 0.0
    %807 = vmatprep.mubr.f32.mxu0 0.0
    %v808 = vand.u32 %v194, 4294901760
    %v809 = vsub.f32 %v194, %v808
    %v810 = vand.u32 %v809, 4294901760
    %v811 = vsub.f32 %v809, %v810
    %v812 = vand.u32 %v811, 4294901760
    %813 = vmatmul.mubr.f32.gmra.mxu0 %v812
    %v814 = vpop.f32.mrf.mxu0
    %v815 = vadd.f32 %v185, %v814
    %v816 = vpop.f32.mrf.mxu0
    %v817 = vadd.f32 %v185, %v816
    %818 = vmatprep.mubr.f32.mxu0 0.0
    %v819 = vand.u32 %v197, 4294901760
    %v820 = vsub.f32 %v197, %v819
    %v821 = vand.u32 %v820, 4294901760
    %v822 = vsub.f32 %v820, %v821
    %v823 = vand.u32 %v822, 4294901760
    %824 = vmatmul.mubr.f32.gmra.mxu0 %v823
    %v825 = vpop.f32.mrf.mxu0
    %v826 = vadd.f32 %v190, %v825
    %v827 = vpop.f32.mrf.mxu0
    %v828 = vadd.f32 %v190, %v827
    %829 = vdwg.mxu0
    %830 = vmatprep.subr.mxu0 0.0
    %831 = vmatpush1.msra.mxu0 0.0
    %832 = vmatprep.subr.mxu0 0.0
    %833 = vmatpush1.msra.mxu0 0.0
    %834 = vmatprep.subr.mxu0 0.0
    %835 = vmatpush1.msra.mxu0 0.0
    %836 = vmatprep.subr.mxu0 0.0
    %837 = vmatpush1.msra.mxu0 0.0
    %838 = vmatprep.subr.mxu0 0.0
    %839 = vmatpush1.msra.mxu0 0.0
    %840 = vmatprep.subr.mxu0 0.0
    %841 = vmatpush1.msra.mxu0 0.0
    %842 = vmatprep.subr.mxu0 0.0
    %843 = vmatpush1.msra.mxu0 0.0
    %844 = vmatprep.subr.mxu0 0.0
    %845 = vmatpush1.msra.mxu0 0.0
    %846 = vmatprep.subr.mxu0 0.0
    %847 = vmatpush1.msra.mxu0 0.0
    %848 = vmatprep.subr.mxu0 0.0
    %849 = vmatpush1.msra.mxu0 0.0
    %850 = vmatprep.subr.mxu0 0.0
    %851 = vmatpush1.msra.mxu0 0.0
    %852 = vmatprep.subr.mxu0 0.0
    %853 = vmatpush1.msra.mxu0 0.0
    %854 = vmatprep.subr.mxu0 0.0
    %855 = vmatpush1.msra.mxu0 0.0
    %856 = vmatprep.subr.mxu0 0.0
    %857 = vmatpush1.msra.mxu0 0.0
    %v858 = vand.u32 %v181, 4294901760
    %v859 = vsub.f32 %v181, %v858
    %v860 = vand.u32 %v859, 4294901760
    %v861 = vsub.f32 %v859, %v860
    %v862 = vand.u32 %v861, 4294901760
    %863 = vmatprep.subr.mxu0 %v862
    %v864 = vand.u32 %v180, 4294901760
    %v865 = vsub.f32 %v180, %v864
    %v866 = vand.u32 %v865, 4294901760
    %v867 = vsub.f32 %v865, %v866
    %v868 = vand.u32 %v867, 4294901760
    %869 = vmatpush1.msra.mxu0 %v868
    %v870 = vand.u32 %v177, 4294901760
    %v871 = vsub.f32 %v177, %v870
    %v872 = vand.u32 %v871, 4294901760
    %v873 = vsub.f32 %v871, %v872
    %v874 = vand.u32 %v873, 4294901760
    %875 = vmatprep.subr.mxu0 %v874
    %v876 = vand.u32 %v176, 4294901760
    %v877 = vsub.f32 %v176, %v876
    %v878 = vand.u32 %v877, 4294901760
    %v879 = vsub.f32 %v877, %v878
    %v880 = vand.u32 %v879, 4294901760
    %881 = vmatpush1.msra.mxu0 %v880
    %882 = vmatprep.subr.mxu0 0.0
    %883 = vmatpush2.msra.mxu0 0.0
    %884 = vmatprep.subr.mxu0 0.0
    %885 = vmatpush2.msra.mxu0 0.0
    %886 = vmatprep.subr.mxu0 0.0
    %887 = vmatpush2.msra.mxu0 0.0
    %888 = vmatprep.subr.mxu0 0.0
    %889 = vmatpush2.msra.mxu0 0.0
    %890 = vmatprep.subr.mxu0 0.0
    %891 = vmatpush2.msra.mxu0 0.0
    %892 = vmatprep.subr.mxu0 0.0
    %893 = vmatpush2.msra.mxu0 0.0
    %894 = vmatprep.subr.mxu0 0.0
    %895 = vmatpush2.msra.mxu0 0.0
    %896 = vmatprep.subr.mxu0 0.0
    %897 = vmatpush2.msra.mxu0 0.0
    %898 = vmatprep.subr.mxu0 0.0
    %899 = vmatpush2.msra.mxu0 0.0
    %900 = vmatprep.subr.mxu0 0.0
    %901 = vmatpush2.msra.mxu0 0.0
    %902 = vmatprep.subr.mxu0 0.0
    %903 = vmatpush2.msra.mxu0 0.0
    %904 = vmatprep.subr.mxu0 0.0
    %905 = vmatpush2.msra.mxu0 0.0
    %906 = vmatprep.subr.mxu0 0.0
    %907 = vmatpush2.msra.mxu0 0.0
    %908 = vmatprep.subr.mxu0 0.0
    %909 = vmatpush2.msra.mxu0 0.0
    %910 = vmatprep.subr.mxu0 0.0
    %911 = vmatpush2.msra.mxu0 0.0
    %912 = vmatprep.subr.mxu0 0.0
    %913 = vmatpush2.msra.mxu0 0.0
    %914 = vmatprep.mubr.f32.mxu0 0.0
    %v915 = vand.u32 %v194, 4294901760
    %916 = vmatmul.mubr.f32.gmra.mxu0 %v915
    %v917 = vpop.f32.mrf.mxu0
    %v918 = vadd.f32 %v815, %v917
    %v919 = vpop.f32.mrf.mxu0
    %v920 = vadd.f32 %v817, %v919
    %921 = vmatprep.mubr.f32.mxu0 0.0
    %v922 = vand.u32 %v197, 4294901760
    %923 = vmatmul.mubr.f32.gmra.mxu0 %v922
    %v924 = vpop.f32.mrf.mxu0
    %v925 = vadd.f32 %v826, %v924
    %v926 = vpop.f32.mrf.mxu0
    %v927 = vadd.f32 %v828, %v926
    %928 = vdwg.mxu0
    %929 = vmatprep.subr.mxu0 0.0
    %930 = vmatpush1.msra.mxu0 0.0
    %931 = vmatprep.subr.mxu0 0.0
    %932 = vmatpush1.msra.mxu0 0.0
    %933 = vmatprep.subr.mxu0 0.0
    %934 = vmatpush1.msra.mxu0 0.0
    %935 = vmatprep.subr.mxu0 0.0
    %936 = vmatpush1.msra.mxu0 0.0
    %937 = vmatprep.subr.mxu0 0.0
    %938 = vmatpush1.msra.mxu0 0.0
    %939 = vmatprep.subr.mxu0 0.0
    %940 = vmatpush1.msra.mxu0 0.0
    %941 = vmatprep.subr.mxu0 0.0
    %942 = vmatpush1.msra.mxu0 0.0
    %943 = vmatprep.subr.mxu0 0.0
    %944 = vmatpush1.msra.mxu0 0.0
    %945 = vmatprep.subr.mxu0 0.0
    %946 = vmatpush1.msra.mxu0 0.0
    %947 = vmatprep.subr.mxu0 0.0
    %948 = vmatpush1.msra.mxu0 0.0
    %949 = vmatprep.subr.mxu0 0.0
    %950 = vmatpush1.msra.mxu0 0.0
    %951 = vmatprep.subr.mxu0 0.0
    %952 = vmatpush1.msra.mxu0 0.0
    %953 = vmatprep.subr.mxu0 0.0
    %954 = vmatpush1.msra.mxu0 0.0
    %955 = vmatprep.subr.mxu0 0.0
    %956 = vmatpush1.msra.mxu0 0.0
    %v957 = vand.u32 %v181, 4294901760
    %v958 = vsub.f32 %v181, %v957
    %959 = vmatprep.subr.mxu0 %v958
    %v960 = vand.u32 %v180, 4294901760
    %v961 = vsub.f32 %v180, %v960
    %962 = vmatpush1.msra.mxu0 %v961
    %v963 = vand.u32 %v177, 4294901760
    %v964 = vsub.f32 %v177, %v963
    %965 = vmatprep.subr.mxu0 %v964
    %v966 = vand.u32 %v176, 4294901760
    %v967 = vsub.f32 %v176, %v966
    %968 = vmatpush1.msra.mxu0 %v967
    %969 = vmatprep.subr.mxu0 0.0
    %970 = vmatpush2.msra.mxu0 0.0
    %971 = vmatprep.subr.mxu0 0.0
    %972 = vmatpush2.msra.mxu0 0.0
    %973 = vmatprep.subr.mxu0 0.0
    %974 = vmatpush2.msra.mxu0 0.0
    %975 = vmatprep.subr.mxu0 0.0
    %976 = vmatpush2.msra.mxu0 0.0
    %977 = vmatprep.subr.mxu0 0.0
    %978 = vmatpush2.msra.mxu0 0.0
    %979 = vmatprep.subr.mxu0 0.0
    %980 = vmatpush2.msra.mxu0 0.0
    %981 = vmatprep.subr.mxu0 0.0
    %982 = vmatpush2.msra.mxu0 0.0
    %983 = vmatprep.subr.mxu0 0.0
    %984 = vmatpush2.msra.mxu0 0.0
    %985 = vmatprep.subr.mxu0 0.0
    %986 = vmatpush2.msra.mxu0 0.0
    %987 = vmatprep.subr.mxu0 0.0
    %988 = vmatpush2.msra.mxu0 0.0
    %989 = vmatprep.subr.mxu0 0.0
    %990 = vmatpush2.msra.mxu0 0.0
    %991 = vmatprep.subr.mxu0 0.0
    %992 = vmatpush2.msra.mxu0 0.0
    %993 = vmatprep.subr.mxu0 0.0
    %994 = vmatpush2.msra.mxu0 0.0
    %995 = vmatprep.subr.mxu0 0.0
    %996 = vmatpush2.msra.mxu0 0.0
    %997 = vmatprep.subr.mxu0 0.0
    %998 = vmatpush2.msra.mxu0 0.0
    %999 = vmatprep.subr.mxu0 0.0
    %1000 = vmatpush2.msra.mxu0 0.0
    %1001 = vmatprep.mubr.f32.mxu0 0.0
    %v1002 = vand.u32 %v194, 4294901760
    %v1003 = vsub.f32 %v194, %v1002
    %1004 = vmatmul.mubr.f32.gmra.mxu0 %v1003
    %v1005 = vpop.f32.mrf.mxu0
    %v1006 = vadd.f32 %v918, %v1005
    %v1007 = vpop.f32.mrf.mxu0
    %v1008 = vadd.f32 %v920, %v1007
    %1009 = vmatprep.mubr.f32.mxu0 0.0
    %v1010 = vand.u32 %v197, 4294901760
    %v1011 = vsub.f32 %v197, %v1010
    %1012 = vmatmul.mubr.f32.gmra.mxu0 %v1011
    %v1013 = vpop.f32.mrf.mxu0
    %v1014 = vadd.f32 %v925, %v1013
    %v1015 = vpop.f32.mrf.mxu0
    %v1016 = vadd.f32 %v927, %v1015
    %1017 = vdwg.mxu0
    %1018 = vmatprep.subr.mxu0 0.0
    %1019 = vmatpush1.msra.mxu0 0.0
    %1020 = vmatprep.subr.mxu0 0.0
    %1021 = vmatpush1.msra.mxu0 0.0
    %1022 = vmatprep.subr.mxu0 0.0
    %1023 = vmatpush1.msra.mxu0 0.0
    %1024 = vmatprep.subr.mxu0 0.0
    %1025 = vmatpush1.msra.mxu0 0.0
    %1026 = vmatprep.subr.mxu0 0.0
    %1027 = vmatpush1.msra.mxu0 0.0
    %1028 = vmatprep.subr.mxu0 0.0
    %1029 = vmatpush1.msra.mxu0 0.0
    %1030 = vmatprep.subr.mxu0 0.0
    %1031 = vmatpush1.msra.mxu0 0.0
    %1032 = vmatprep.subr.mxu0 0.0
    %1033 = vmatpush1.msra.mxu0 0.0
    %1034 = vmatprep.subr.mxu0 0.0
    %1035 = vmatpush1.msra.mxu0 0.0
    %1036 = vmatprep.subr.mxu0 0.0
    %1037 = vmatpush1.msra.mxu0 0.0
    %1038 = vmatprep.subr.mxu0 0.0
    %1039 = vmatpush1.msra.mxu0 0.0
    %1040 = vmatprep.subr.mxu0 0.0
    %1041 = vmatpush1.msra.mxu0 0.0
    %1042 = vmatprep.subr.mxu0 0.0
    %1043 = vmatpush1.msra.mxu0 0.0
    %1044 = vmatprep.subr.mxu0 0.0
    %1045 = vmatpush1.msra.mxu0 0.0
    %v1046 = vand.u32 %v181, 4294901760
    %1047 = vmatprep.subr.mxu0 %v1046
    %v1048 = vand.u32 %v180, 4294901760
    %1049 = vmatpush1.msra.mxu0 %v1048
    %v1050 = vand.u32 %v177, 4294901760
    %1051 = vmatprep.subr.mxu0 %v1050
    %v1052 = vand.u32 %v176, 4294901760
    %1053 = vmatpush1.msra.mxu0 %v1052
    %1054 = vmatprep.subr.mxu0 0.0
    %1055 = vmatpush2.msra.mxu0 0.0
    %1056 = vmatprep.subr.mxu0 0.0
    %1057 = vmatpush2.msra.mxu0 0.0
    %1058 = vmatprep.subr.mxu0 0.0
    %1059 = vmatpush2.msra.mxu0 0.0
    %1060 = vmatprep.subr.mxu0 0.0
    %1061 = vmatpush2.msra.mxu0 0.0
    %1062 = vmatprep.subr.mxu0 0.0
    %1063 = vmatpush2.msra.mxu0 0.0
    %1064 = vmatprep.subr.mxu0 0.0
    %1065 = vmatpush2.msra.mxu0 0.0
    %1066 = vmatprep.subr.mxu0 0.0
    %1067 = vmatpush2.msra.mxu0 0.0
    %1068 = vmatprep.subr.mxu0 0.0
    %1069 = vmatpush2.msra.mxu0 0.0
    %1070 = vmatprep.subr.mxu0 0.0
    %1071 = vmatpush2.msra.mxu0 0.0
    %1072 = vmatprep.subr.mxu0 0.0
    %1073 = vmatpush2.msra.mxu0 0.0
    %1074 = vmatprep.subr.mxu0 0.0
    %1075 = vmatpush2.msra.mxu0 0.0
    %1076 = vmatprep.subr.mxu0 0.0
    %1077 = vmatpush2.msra.mxu0 0.0
    %1078 = vmatprep.subr.mxu0 0.0
    %1079 = vmatpush2.msra.mxu0 0.0
    %1080 = vmatprep.subr.mxu0 0.0
    %1081 = vmatpush2.msra.mxu0 0.0
    %1082 = vmatprep.subr.mxu0 0.0
    %1083 = vmatpush2.msra.mxu0 0.0
    %1084 = vmatprep.subr.mxu0 0.0
    %1085 = vmatpush2.msra.mxu0 0.0
    %1086 = vmatprep.mubr.f32.mxu0 0.0
    %v1087 = vand.u32 %v194, 4294901760
    %v1088 = vsub.f32 %v194, %v1087
    %v1089 = vand.u32 %v1088, 4294901760
    %1090 = vmatmul.mubr.f32.gmra.mxu0 %v1089
    %v1091 = vpop.f32.mrf.mxu0
    %v1092 = vadd.f32 %v1006, %v1091
    %v1093 = vpop.f32.mrf.mxu0
    %v1094 = vadd.f32 %v1008, %v1093
    %1095 = vmatprep.mubr.f32.mxu0 0.0
    %v1096 = vand.u32 %v197, 4294901760
    %v1097 = vsub.f32 %v197, %v1096
    %v1098 = vand.u32 %v1097, 4294901760
    %1099 = vmatmul.mubr.f32.gmra.mxu0 %v1098
    %v1100 = vpop.f32.mrf.mxu0
    %v1101 = vadd.f32 %v1014, %v1100
    %v1102 = vpop.f32.mrf.mxu0
    %v1103 = vadd.f32 %v1016, %v1102
    %1104 = vdwg.mxu0
    %1105 = vmatprep.subr.mxu0 0.0
    %1106 = vmatpush1.msra.mxu0 0.0
    %1107 = vmatprep.subr.mxu0 0.0
    %1108 = vmatpush1.msra.mxu0 0.0
    %1109 = vmatprep.subr.mxu0 0.0
    %1110 = vmatpush1.msra.mxu0 0.0
    %1111 = vmatprep.subr.mxu0 0.0
    %1112 = vmatpush1.msra.mxu0 0.0
    %1113 = vmatprep.subr.mxu0 0.0
    %1114 = vmatpush1.msra.mxu0 0.0
    %1115 = vmatprep.subr.mxu0 0.0
    %1116 = vmatpush1.msra.mxu0 0.0
    %1117 = vmatprep.subr.mxu0 0.0
    %1118 = vmatpush1.msra.mxu0 0.0
    %1119 = vmatprep.subr.mxu0 0.0
    %1120 = vmatpush1.msra.mxu0 0.0
    %1121 = vmatprep.subr.mxu0 0.0
    %1122 = vmatpush1.msra.mxu0 0.0
    %1123 = vmatprep.subr.mxu0 0.0
    %1124 = vmatpush1.msra.mxu0 0.0
    %1125 = vmatprep.subr.mxu0 0.0
    %1126 = vmatpush1.msra.mxu0 0.0
    %1127 = vmatprep.subr.mxu0 0.0
    %1128 = vmatpush1.msra.mxu0 0.0
    %1129 = vmatprep.subr.mxu0 0.0
    %1130 = vmatpush1.msra.mxu0 0.0
    %1131 = vmatprep.subr.mxu0 0.0
    %1132 = vmatpush1.msra.mxu0 0.0
    %v1133 = vand.u32 %v181, 4294901760
    %v1134 = vsub.f32 %v181, %v1133
    %v1135 = vand.u32 %v1134, 4294901760
    %1136 = vmatprep.subr.mxu0 %v1135
    %v1137 = vand.u32 %v180, 4294901760
    %v1138 = vsub.f32 %v180, %v1137
    %v1139 = vand.u32 %v1138, 4294901760
    %1140 = vmatpush1.msra.mxu0 %v1139
    %v1141 = vand.u32 %v177, 4294901760
    %v1142 = vsub.f32 %v177, %v1141
    %v1143 = vand.u32 %v1142, 4294901760
    %1144 = vmatprep.subr.mxu0 %v1143
    %v1145 = vand.u32 %v176, 4294901760
    %v1146 = vsub.f32 %v176, %v1145
    %v1147 = vand.u32 %v1146, 4294901760
    %1148 = vmatpush1.msra.mxu0 %v1147
    %1149 = vmatprep.subr.mxu0 0.0
    %1150 = vmatpush2.msra.mxu0 0.0
    %1151 = vmatprep.subr.mxu0 0.0
    %1152 = vmatpush2.msra.mxu0 0.0
    %1153 = vmatprep.subr.mxu0 0.0
    %1154 = vmatpush2.msra.mxu0 0.0
    %1155 = vmatprep.subr.mxu0 0.0
    %1156 = vmatpush2.msra.mxu0 0.0
    %1157 = vmatprep.subr.mxu0 0.0
    %1158 = vmatpush2.msra.mxu0 0.0
    %1159 = vmatprep.subr.mxu0 0.0
    %1160 = vmatpush2.msra.mxu0 0.0
    %1161 = vmatprep.subr.mxu0 0.0
    %1162 = vmatpush2.msra.mxu0 0.0
    %1163 = vmatprep.subr.mxu0 0.0
    %1164 = vmatpush2.msra.mxu0 0.0
    %1165 = vmatprep.subr.mxu0 0.0
    %1166 = vmatpush2.msra.mxu0 0.0
    %1167 = vmatprep.subr.mxu0 0.0
    %1168 = vmatpush2.msra.mxu0 0.0
    %1169 = vmatprep.subr.mxu0 0.0
    %1170 = vmatpush2.msra.mxu0 0.0
    %1171 = vmatprep.subr.mxu0 0.0
    %1172 = vmatpush2.msra.mxu0 0.0
    %1173 = vmatprep.subr.mxu0 0.0
    %1174 = vmatpush2.msra.mxu0 0.0
    %1175 = vmatprep.subr.mxu0 0.0
    %1176 = vmatpush2.msra.mxu0 0.0
    %1177 = vmatprep.subr.mxu0 0.0
    %1178 = vmatpush2.msra.mxu0 0.0
    %1179 = vmatprep.subr.mxu0 0.0
    %1180 = vmatpush2.msra.mxu0 0.0
    %1181 = vmatprep.mubr.f32.mxu0 0.0
    %v1182 = vand.u32 %v194, 4294901760
    %1183 = vmatmul.mubr.f32.gmra.mxu0 %v1182
    %v1184 = vpop.f32.mrf.mxu0
    %v1185 = vadd.f32 %v1092, %v1184
    %v1186 = vpop.f32.mrf.mxu0
    %v1187 = vadd.f32 %v1094, %v1186
    %1188 = vmatprep.mubr.f32.mxu0 0.0
    %v1189 = vand.u32 %v197, 4294901760
    %1190 = vmatmul.mubr.f32.gmra.mxu0 %v1189
    %v1191 = vpop.f32.mrf.mxu0
    %v1192 = vadd.f32 %v1101, %v1191
    %v1193 = vpop.f32.mrf.mxu0
    %v1194 = vadd.f32 %v1103, %v1193
    %1195 = vdwg.mxu0
    %1196 = vmatprep.subr.mxu0 0.0
    %1197 = vmatpush1.msra.mxu0 0.0
    %1198 = vmatprep.subr.mxu0 0.0
    %1199 = vmatpush1.msra.mxu0 0.0
    %1200 = vmatprep.subr.mxu0 0.0
    %1201 = vmatpush1.msra.mxu0 0.0
    %1202 = vmatprep.subr.mxu0 0.0
    %1203 = vmatpush1.msra.mxu0 0.0
    %1204 = vmatprep.subr.mxu0 0.0
    %1205 = vmatpush1.msra.mxu0 0.0
    %1206 = vmatprep.subr.mxu0 0.0
    %1207 = vmatpush1.msra.mxu0 0.0
    %1208 = vmatprep.subr.mxu0 0.0
    %1209 = vmatpush1.msra.mxu0 0.0
    %1210 = vmatprep.subr.mxu0 0.0
    %1211 = vmatpush1.msra.mxu0 0.0
    %1212 = vmatprep.subr.mxu0 0.0
    %1213 = vmatpush1.msra.mxu0 0.0
    %1214 = vmatprep.subr.mxu0 0.0
    %1215 = vmatpush1.msra.mxu0 0.0
    %1216 = vmatprep.subr.mxu0 0.0
    %1217 = vmatpush1.msra.mxu0 0.0
    %1218 = vmatprep.subr.mxu0 0.0
    %1219 = vmatpush1.msra.mxu0 0.0
    %1220 = vmatprep.subr.mxu0 0.0
    %1221 = vmatpush1.msra.mxu0 0.0
    %1222 = vmatprep.subr.mxu0 0.0
    %1223 = vmatpush1.msra.mxu0 0.0
    %v1224 = vand.u32 %v181, 4294901760
    %1225 = vmatprep.subr.mxu0 %v1224
    %v1226 = vand.u32 %v180, 4294901760
    %1227 = vmatpush1.msra.mxu0 %v1226
    %v1228 = vand.u32 %v177, 4294901760
    %1229 = vmatprep.subr.mxu0 %v1228
    %v1230 = vand.u32 %v176, 4294901760
    %1231 = vmatpush1.msra.mxu0 %v1230
    %1232 = vmatprep.subr.mxu0 0.0
    %1233 = vmatpush2.msra.mxu0 0.0
    %1234 = vmatprep.subr.mxu0 0.0
    %1235 = vmatpush2.msra.mxu0 0.0
    %1236 = vmatprep.subr.mxu0 0.0
    %1237 = vmatpush2.msra.mxu0 0.0
    %1238 = vmatprep.subr.mxu0 0.0
    %1239 = vmatpush2.msra.mxu0 0.0
    %1240 = vmatprep.subr.mxu0 0.0
    %1241 = vmatpush2.msra.mxu0 0.0
    %1242 = vmatprep.subr.mxu0 0.0
    %1243 = vmatpush2.msra.mxu0 0.0
    %1244 = vmatprep.subr.mxu0 0.0
    %1245 = vmatpush2.msra.mxu0 0.0
    %1246 = vmatprep.subr.mxu0 0.0
    %1247 = vmatpush2.msra.mxu0 0.0
    %1248 = vmatprep.subr.mxu0 0.0
    %1249 = vmatpush2.msra.mxu0 0.0
    %1250 = vmatprep.subr.mxu0 0.0
    %1251 = vmatpush2.msra.mxu0 0.0
    %1252 = vmatprep.subr.mxu0 0.0
    %1253 = vmatpush2.msra.mxu0 0.0
    %1254 = vmatprep.subr.mxu0 0.0
    %1255 = vmatpush2.msra.mxu0 0.0
    %1256 = vmatprep.subr.mxu0 0.0
    %1257 = vmatpush2.msra.mxu0 0.0
    %1258 = vmatprep.subr.mxu0 0.0
    %1259 = vmatpush2.msra.mxu0 0.0
    %1260 = vmatprep.subr.mxu0 0.0
    %1261 = vmatpush2.msra.mxu0 0.0
    %1262 = vmatprep.subr.mxu0 0.0
    %1263 = vmatpush2.msra.mxu0 0.0
    %1264 = vmatprep.mubr.f32.mxu0 0.0
    %v1265 = vand.u32 %v194, 4294901760
    %1266 = vmatmul.mubr.f32.gmra.mxu0 %v1265
    %v1267 = vpop.f32.mrf.mxu0
    %v1268 = vadd.f32 %v1185, %v1267
    %v1269 = vpop.f32.mrf.mxu0
    %v1270 = vadd.f32 %v1187, %v1269
    %1271 = vmatprep.mubr.f32.mxu0 0.0
    %v1272 = vand.u32 %v197, 4294901760
    %1273 = vmatmul.mubr.f32.gmra.mxu0 %v1272
    %v1274 = vpop.f32.mrf.mxu0
    %v1275 = vadd.f32 %v1192, %v1274
    %v1276 = vpop.f32.mrf.mxu0
    %v1277 = vadd.f32 %v1194, %v1276
    %1278 = vdwg.mxu0
    %v1279 = vmax.f32 %v728, 0.0
    %v1280 = vmax.f32 %v730, 0.0
    %v1281 = vmax.f32 %v1268, 0.0
    %v1282 = vmax.f32 %v1270, 0.0
    %v1283 = vmax.f32 %v735, 0.0
    %v1284 = vmax.f32 %v737, 0.0
    %v1285 = vmax.f32 %v1275, 0.0
    %v1286 = vmax.f32 %v1277, 0.0
    %1288 = vset.pattern.permute.xlu0 0
    %1289 = vperm.xlu0 %1288, %v37
    %v1290 = vpop.permute.xlu0 %1289
    %1293 = vset.pattern.permute.xlu0 0
    %1294 = vperm.xlu0 %1293, %v38
    %v1295 = vpop.permute.xlu0 %1294
    %v1297 = vmul.f32 %v1290, %v1279
    %v1298 = vmul.f32 %v1290, %v1280
    %v1299 = vmul.f32 %v1290, %v1281
    %v1300 = vmul.f32 %v1290, %v1282
    %v1301 = vmul.f32 %v1295, %v1283
    %v1302 = vmul.f32 %v1295, %v1284
    %v1303 = vmul.f32 %v1295, %v1285
    %v1304 = vmul.f32 %v1295, %v1286
    %v1305 = vadd.f32 %v1297, %v1301
    %v1306 = vrot.slane %v1305, 4
    %v1307 = vadd.f32 %v1305, %v1306
    %v1308 = vrot.slane %v1307, 2
    %v1309 = vadd.f32 %v1307, %v1308
    %v1310 = vrot.slane %v1309, 1
    %v1311 = vadd.f32 %v1309, %v1310
    %v1312 = vadd.f32 %v1298, %v1302
    %v1313 = vrot.slane %v1312, 4
    %v1314 = vadd.f32 %v1312, %v1313
    %v1315 = vrot.slane %v1314, 2
    %v1316 = vadd.f32 %v1314, %v1315
    %v1317 = vrot.slane %v1316, 1
    %v1318 = vadd.f32 %v1316, %v1317
    %v1319 = vadd.f32 %v1299, %v1303
    %v1320 = vrot.slane %v1319, 4
    %v1321 = vadd.f32 %v1319, %v1320
    %v1322 = vrot.slane %v1321, 2
    %v1323 = vadd.f32 %v1321, %v1322
    %v1324 = vrot.slane %v1323, 1
    %v1325 = vadd.f32 %v1323, %v1324
    %v1326 = vadd.f32 %v1300, %v1304
    %v1327 = vrot.slane %v1326, 4
    %v1328 = vadd.f32 %v1326, %v1327
    %v1329 = vrot.slane %v1328, 2
    %v1330 = vadd.f32 %v1328, %v1329
    %v1331 = vrot.slane %v1330, 1
    %v1332 = vadd.f32 %v1330, %v1331
    %1334 = vset.pattern.permute.xlu0 0
    %1335 = vperm.xlu0 %1334, %v39
    %v1336 = vpop.permute.xlu0 %1335
    %v1338 = vlaneseq
    %v1339 = vshrl.u32 %v1338, 7
    %v1340 = vsub.s32 0, %v1339
    %v1341 = vrot.slane %v1336, %v1340
    %v1342 = vadd.f32 %v1311, %v1341
    %v1343 = vadd.f32 %v1318, %v1341
    %v1344 = vadd.f32 %v1325, %v1341
    %v1345 = vadd.f32 %v1332, %v1341
    %v1350 = vcombine.low %v1342, %v1343
    %v1351 = vcombine.low %v1344, %v1345
    %v1353 = vunpack.c.l.s4 1966171168
    %v1354 = vunpack.c.0.s8 %v1353
    %v1355 = vlaneseq
    %v1356 = vshrl.u32 %v1355, 7
    %v1357 = vsub.s32 %v1354, %v1356
    %v1358 = vrot.slane %v1350, %v1357
    %v1360 = vunpack.c.l.s4 1966171168
    %v1361 = vunpack.c.0.s8 %v1360
    %v1362 = vlaneseq
    %v1363 = vshrl.u32 %v1362, 7
    %v1364 = vsub.s32 %v1361, %v1363
    %v1365 = vrot.slane %v1351, %v1364
    %v1366 = vcombine.low %v1358, %v1365
    %v1368 = vunpack.c.l.s4 1966171168
    %v1369 = vunpack.c.0.s8 %v1368
    %v1370 = vlaneseq
    %v1371 = vshrl.u32 %v1370, 7
    %v1372 = vsub.s32 %v1369, %v1371
    %v1373 = vrot.slane %v1366, %v1372
    %v1375 = vlaneseq
    %vm1376 = vcmp.ge.s32.totalorder %v1375, 0
    %vm1377 = vcmp.lt.s32.totalorder %v1375, 512
    %vm1378 = vmand %vm1376, %vm1377
    %1379 = vst.msk [vmem:[#allocation3] sm:$0xf] %vm1378, %v1373
    %v1380 = vld [vmem:[%s6 + $0x8] sm:$0xff]
    %v1382 = vlaneseq
    %v1383 = vshrl.u32 %v1382, 7
    %v1384 = vsub.s32 0, %v1383
    %v1385 = vrot.slane %v1380, %v1384
    %v1386 = vlaneseq
    %v1387 = vshrl.u32 %v1386, 7
    %v1388 = vsub.s32 2, %v1387
    %v1389 = vrot.slane %v1380, %v1388
    %v1390 = vlaneseq
    %v1391 = vshrl.u32 %v1390, 7
    %v1392 = vsub.s32 4, %v1391
    %v1393 = vrot.slane %v1380, %v1392
    %v1394 = vlaneseq
    %v1395 = vshrl.u32 %v1394, 7
    %v1396 = vsub.s32 6, %v1395
    %v1397 = vrot.slane %v1380, %v1396
    %v1402 = vlaneseq
    %v1403 = vshrl.u32 %v1402, 7
    %v1404 = vsub.s32 0, %v1403
    %v1405 = vrot.slane %v1385, %v1404
    %v1406 = vlaneseq
    %v1407 = vshrl.u32 %v1406, 7
    %v1408 = vsub.s32 0, %v1407
    %v1409 = vrot.slane %v1389, %v1408
    %v1410 = vlaneseq
    %v1411 = vshrl.u32 %v1410, 7
    %v1412 = vsub.s32 0, %v1411
    %v1413 = vrot.slane %v1393, %v1412
    %v1414 = vlaneseq
    %v1415 = vshrl.u32 %v1414, 7
    %v1416 = vsub.s32 0, %v1415
    %v1417 = vrot.slane %v1397, %v1416
    %v1418 = vmul.f32 %v44, %v1405
    %v1419 = vmul.f32 %v44, %v1409
    %v1420 = vmul.f32 %v44, %v1413
    %v1421 = vmul.f32 %v44, %v1417
    %v1422 = vmul.f32 %v49, %v1405
    %v1423 = vmul.f32 %v49, %v1409
    %v1424 = vmul.f32 %v49, %v1413
    %v1425 = vmul.f32 %v49, %v1417
    %v1426 = vadd.f32 %v99, %v1418
    %v1427 = vadd.f32 %v99, %v1419
    %v1428 = vadd.f32 %v99, %v1420
    %v1429 = vadd.f32 %v99, %v1421
    %v1430 = vadd.f32 %v104, %v1422
    %v1431 = vadd.f32 %v104, %v1423
    %v1432 = vadd.f32 %v104, %v1424
    %v1433 = vadd.f32 %v104, %v1425
    %v1434 = vlaneseq
    %v1435 = vshrl.u32 %v1434, 7
    %v1436 = vsub.s32 1, %v1435
    %v1437 = vrot.slane %v1380, %v1436
    %v1438 = vlaneseq
    %v1439 = vshrl.u32 %v1438, 7
    %v1440 = vsub.s32 3, %v1439
    %v1441 = vrot.slane %v1380, %v1440
    %v1442 = vlaneseq
    %v1443 = vshrl.u32 %v1442, 7
    %v1444 = vsub.s32 5, %v1443
    %v1445 = vrot.slane %v1380, %v1444
    %v1446 = vlaneseq
    %v1447 = vshrl.u32 %v1446, 7
    %v1448 = vsub.s32 7, %v1447
    %v1449 = vrot.slane %v1380, %v1448
    %v1454 = vlaneseq
    %v1455 = vshrl.u32 %v1454, 7
    %v1456 = vsub.s32 1, %v1455
    %v1457 = vrot.slane %v1437, %v1456
    %v1458 = vlaneseq
    %v1459 = vshrl.u32 %v1458, 7
    %v1460 = vsub.s32 1, %v1459
    %v1461 = vrot.slane %v1441, %v1460
    %v1462 = vlaneseq
    %v1463 = vshrl.u32 %v1462, 7
    %v1464 = vsub.s32 1, %v1463
    %v1465 = vrot.slane %v1445, %v1464
    %v1466 = vlaneseq
    %v1467 = vshrl.u32 %v1466, 7
    %v1468 = vsub.s32 1, %v1467
    %v1469 = vrot.slane %v1449, %v1468
    %v1470 = vmul.f32 %v116, %v1457
    %v1471 = vmul.f32 %v116, %v1461
    %v1472 = vmul.f32 %v116, %v1465
    %v1473 = vmul.f32 %v116, %v1469
    %v1474 = vmul.f32 %v120, %v1457
    %v1475 = vmul.f32 %v120, %v1461
    %v1476 = vmul.f32 %v120, %v1465
    %v1477 = vmul.f32 %v120, %v1469
    %v1478 = vadd.f32 %v1426, %v1470
    %v1479 = vadd.f32 %v1427, %v1471
    %v1480 = vadd.f32 %v1428, %v1472
    %v1481 = vadd.f32 %v1429, %v1473
    %v1482 = vadd.f32 %v1430, %v1474
    %v1483 = vadd.f32 %v1431, %v1475
    %v1484 = vadd.f32 %v1432, %v1476
    %v1485 = vadd.f32 %v1433, %v1477
    %v1486 = vmax.f32 %v1478, 0.0
    %v1487 = vmax.f32 %v1479, 0.0
    %v1488 = vmax.f32 %v1480, 0.0
    %v1489 = vmax.f32 %v1481, 0.0
    %v1490 = vmax.f32 %v1482, 0.0
    %v1491 = vmax.f32 %v1483, 0.0
    %v1492 = vmax.f32 %v1484, 0.0
    %v1493 = vmax.f32 %v1485, 0.0
    %1494 = vmatprep.subr.mxu0 0.0
    %1495 = vmatpush1.msra.mxu0 0.0
    %1496 = vmatprep.subr.mxu0 0.0
    %1497 = vmatpush1.msra.mxu0 0.0
    %1498 = vmatprep.subr.mxu0 0.0
    %1499 = vmatpush1.msra.mxu0 0.0
    %1500 = vmatprep.subr.mxu0 0.0
    %1501 = vmatpush1.msra.mxu0 0.0
    %1502 = vmatprep.subr.mxu0 0.0
    %1503 = vmatpush1.msra.mxu0 0.0
    %1504 = vmatprep.subr.mxu0 0.0
    %1505 = vmatpush1.msra.mxu0 0.0
    %1506 = vmatprep.subr.mxu0 0.0
    %1507 = vmatpush1.msra.mxu0 0.0
    %1508 = vmatprep.subr.mxu0 0.0
    %1509 = vmatpush1.msra.mxu0 0.0
    %1510 = vmatprep.subr.mxu0 0.0
    %1511 = vmatpush1.msra.mxu0 0.0
    %1512 = vmatprep.subr.mxu0 0.0
    %1513 = vmatpush1.msra.mxu0 0.0
    %1514 = vmatprep.subr.mxu0 0.0
    %1515 = vmatpush1.msra.mxu0 0.0
    %1516 = vmatprep.subr.mxu0 0.0
    %1517 = vmatpush1.msra.mxu0 0.0
    %1518 = vmatprep.subr.mxu0 0.0
    %1519 = vmatpush1.msra.mxu0 0.0
    %1520 = vmatprep.subr.mxu0 0.0
    %1521 = vmatpush1.msra.mxu0 0.0
    %v1522 = vand.u32 %v1491, 4294901760
    %1523 = vmatprep.subr.mxu0 %v1522
    %v1524 = vand.u32 %v1490, 4294901760
    %1525 = vmatpush1.msra.mxu0 %v1524
    %v1526 = vand.u32 %v1487, 4294901760
    %1527 = vmatprep.subr.mxu0 %v1526
    %v1528 = vand.u32 %v1486, 4294901760
    %1529 = vmatpush1.msra.mxu0 %v1528
    %1530 = vmatprep.subr.mxu0 0.0
    %1531 = vmatpush2.msra.mxu0 0.0
    %1532 = vmatprep.subr.mxu0 0.0
    %1533 = vmatpush2.msra.mxu0 0.0
    %1534 = vmatprep.subr.mxu0 0.0
    %1535 = vmatpush2.msra.mxu0 0.0
    %1536 = vmatprep.subr.mxu0 0.0
    %1537 = vmatpush2.msra.mxu0 0.0
    %1538 = vmatprep.subr.mxu0 0.0
    %1539 = vmatpush2.msra.mxu0 0.0
    %1540 = vmatprep.subr.mxu0 0.0
    %1541 = vmatpush2.msra.mxu0 0.0
    %1542 = vmatprep.subr.mxu0 0.0
    %1543 = vmatpush2.msra.mxu0 0.0
    %1544 = vmatprep.subr.mxu0 0.0
    %1545 = vmatpush2.msra.mxu0 0.0
    %1546 = vmatprep.subr.mxu0 0.0
    %1547 = vmatpush2.msra.mxu0 0.0
    %1548 = vmatprep.subr.mxu0 0.0
    %1549 = vmatpush2.msra.mxu0 0.0
    %1550 = vmatprep.subr.mxu0 0.0
    %1551 = vmatpush2.msra.mxu0 0.0
    %1552 = vmatprep.subr.mxu0 0.0
    %1553 = vmatpush2.msra.mxu0 0.0
    %1554 = vmatprep.subr.mxu0 0.0
    %1555 = vmatpush2.msra.mxu0 0.0
    %1556 = vmatprep.subr.mxu0 0.0
    %1557 = vmatpush2.msra.mxu0 0.0
    %1558 = vmatprep.subr.mxu0 0.0
    %1559 = vmatpush2.msra.mxu0 0.0
    %1560 = vmatprep.subr.mxu0 0.0
    %1561 = vmatpush2.msra.mxu0 0.0
    %1562 = vmatprep.mubr.f32.mxu0 0.0
    %v1563 = vand.u32 %v194, 4294901760
    %v1564 = vsub.f32 %v194, %v1563
    %v1565 = vand.u32 %v1564, 4294901760
    %v1566 = vsub.f32 %v1564, %v1565
    %v1567 = vand.u32 %v1566, 4294901760
    %1568 = vmatmul.mubr.f32.gmra.mxu0 %v1567
    %v1569 = vpop.f32.mrf.mxu0
    %v1570 = vadd.f32 %v185, %v1569
    %v1571 = vpop.f32.mrf.mxu0
    %v1572 = vadd.f32 %v185, %v1571
    %1573 = vmatprep.mubr.f32.mxu0 0.0
    %v1574 = vand.u32 %v197, 4294901760
    %v1575 = vsub.f32 %v197, %v1574
    %v1576 = vand.u32 %v1575, 4294901760
    %v1577 = vsub.f32 %v1575, %v1576
    %v1578 = vand.u32 %v1577, 4294901760
    %1579 = vmatmul.mubr.f32.gmra.mxu0 %v1578
    %v1580 = vpop.f32.mrf.mxu0
    %v1581 = vadd.f32 %v190, %v1580
    %v1582 = vpop.f32.mrf.mxu0
    %v1583 = vadd.f32 %v190, %v1582
    %1584 = vdwg.mxu0
    %1585 = vmatprep.subr.mxu0 0.0
    %1586 = vmatpush1.msra.mxu0 0.0
    %1587 = vmatprep.subr.mxu0 0.0
    %1588 = vmatpush1.msra.mxu0 0.0
    %1589 = vmatprep.subr.mxu0 0.0
    %1590 = vmatpush1.msra.mxu0 0.0
    %1591 = vmatprep.subr.mxu0 0.0
    %1592 = vmatpush1.msra.mxu0 0.0
    %1593 = vmatprep.subr.mxu0 0.0
    %1594 = vmatpush1.msra.mxu0 0.0
    %1595 = vmatprep.subr.mxu0 0.0
    %1596 = vmatpush1.msra.mxu0 0.0
    %1597 = vmatprep.subr.mxu0 0.0
    %1598 = vmatpush1.msra.mxu0 0.0
    %1599 = vmatprep.subr.mxu0 0.0
    %1600 = vmatpush1.msra.mxu0 0.0
    %1601 = vmatprep.subr.mxu0 0.0
    %1602 = vmatpush1.msra.mxu0 0.0
    %1603 = vmatprep.subr.mxu0 0.0
    %1604 = vmatpush1.msra.mxu0 0.0
    %1605 = vmatprep.subr.mxu0 0.0
    %1606 = vmatpush1.msra.mxu0 0.0
    %1607 = vmatprep.subr.mxu0 0.0
    %1608 = vmatpush1.msra.mxu0 0.0
    %1609 = vmatprep.subr.mxu0 0.0
    %1610 = vmatpush1.msra.mxu0 0.0
    %1611 = vmatprep.subr.mxu0 0.0
    %1612 = vmatpush1.msra.mxu0 0.0
    %v1613 = vand.u32 %v1491, 4294901760
    %v1614 = vsub.f32 %v1491, %v1613
    %v1615 = vand.u32 %v1614, 4294901760
    %v1616 = vsub.f32 %v1614, %v1615
    %v1617 = vand.u32 %v1616, 4294901760
    %1618 = vmatprep.subr.mxu0 %v1617
    %v1619 = vand.u32 %v1490, 4294901760
    %v1620 = vsub.f32 %v1490, %v1619
    %v1621 = vand.u32 %v1620, 4294901760
    %v1622 = vsub.f32 %v1620, %v1621
    %v1623 = vand.u32 %v1622, 4294901760
    %1624 = vmatpush1.msra.mxu0 %v1623
    %v1625 = vand.u32 %v1487, 4294901760
    %v1626 = vsub.f32 %v1487, %v1625
    %v1627 = vand.u32 %v1626, 4294901760
    %v1628 = vsub.f32 %v1626, %v1627
    %v1629 = vand.u32 %v1628, 4294901760
    %1630 = vmatprep.subr.mxu0 %v1629
    %v1631 = vand.u32 %v1486, 4294901760
    %v1632 = vsub.f32 %v1486, %v1631
    %v1633 = vand.u32 %v1632, 4294901760
    %v1634 = vsub.f32 %v1632, %v1633
    %v1635 = vand.u32 %v1634, 4294901760
    %1636 = vmatpush1.msra.mxu0 %v1635
    %1637 = vmatprep.subr.mxu0 0.0
    %1638 = vmatpush2.msra.mxu0 0.0
    %1639 = vmatprep.subr.mxu0 0.0
    %1640 = vmatpush2.msra.mxu0 0.0
    %1641 = vmatprep.subr.mxu0 0.0
    %1642 = vmatpush2.msra.mxu0 0.0
    %1643 = vmatprep.subr.mxu0 0.0
    %1644 = vmatpush2.msra.mxu0 0.0
    %1645 = vmatprep.subr.mxu0 0.0
    %1646 = vmatpush2.msra.mxu0 0.0
    %1647 = vmatprep.subr.mxu0 0.0
    %1648 = vmatpush2.msra.mxu0 0.0
    %1649 = vmatprep.subr.mxu0 0.0
    %1650 = vmatpush2.msra.mxu0 0.0
    %1651 = vmatprep.subr.mxu0 0.0
    %1652 = vmatpush2.msra.mxu0 0.0
    %1653 = vmatprep.subr.mxu0 0.0
    %1654 = vmatpush2.msra.mxu0 0.0
    %1655 = vmatprep.subr.mxu0 0.0
    %1656 = vmatpush2.msra.mxu0 0.0
    %1657 = vmatprep.subr.mxu0 0.0
    %1658 = vmatpush2.msra.mxu0 0.0
    %1659 = vmatprep.subr.mxu0 0.0
    %1660 = vmatpush2.msra.mxu0 0.0
    %1661 = vmatprep.subr.mxu0 0.0
    %1662 = vmatpush2.msra.mxu0 0.0
    %1663 = vmatprep.subr.mxu0 0.0
    %1664 = vmatpush2.msra.mxu0 0.0
    %1665 = vmatprep.subr.mxu0 0.0
    %1666 = vmatpush2.msra.mxu0 0.0
    %1667 = vmatprep.subr.mxu0 0.0
    %1668 = vmatpush2.msra.mxu0 0.0
    %1669 = vmatprep.mubr.f32.mxu0 0.0
    %v1670 = vand.u32 %v194, 4294901760
    %1671 = vmatmul.mubr.f32.gmra.mxu0 %v1670
    %v1672 = vpop.f32.mrf.mxu0
    %v1673 = vadd.f32 %v1570, %v1672
    %v1674 = vpop.f32.mrf.mxu0
    %v1675 = vadd.f32 %v1572, %v1674
    %1676 = vmatprep.mubr.f32.mxu0 0.0
    %v1677 = vand.u32 %v197, 4294901760
    %1678 = vmatmul.mubr.f32.gmra.mxu0 %v1677
    %v1679 = vpop.f32.mrf.mxu0
    %v1680 = vadd.f32 %v1581, %v1679
    %v1681 = vpop.f32.mrf.mxu0
    %v1682 = vadd.f32 %v1583, %v1681
    %1683 = vdwg.mxu0
    %1684 = vmatprep.subr.mxu0 0.0
    %1685 = vmatpush1.msra.mxu0 0.0
    %1686 = vmatprep.subr.mxu0 0.0
    %1687 = vmatpush1.msra.mxu0 0.0
    %1688 = vmatprep.subr.mxu0 0.0
    %1689 = vmatpush1.msra.mxu0 0.0
    %1690 = vmatprep.subr.mxu0 0.0
    %1691 = vmatpush1.msra.mxu0 0.0
    %1692 = vmatprep.subr.mxu0 0.0
    %1693 = vmatpush1.msra.mxu0 0.0
    %1694 = vmatprep.subr.mxu0 0.0
    %1695 = vmatpush1.msra.mxu0 0.0
    %1696 = vmatprep.subr.mxu0 0.0
    %1697 = vmatpush1.msra.mxu0 0.0
    %1698 = vmatprep.subr.mxu0 0.0
    %1699 = vmatpush1.msra.mxu0 0.0
    %1700 = vmatprep.subr.mxu0 0.0
    %1701 = vmatpush1.msra.mxu0 0.0
    %1702 = vmatprep.subr.mxu0 0.0
    %1703 = vmatpush1.msra.mxu0 0.0
    %1704 = vmatprep.subr.mxu0 0.0
    %1705 = vmatpush1.msra.mxu0 0.0
    %1706 = vmatprep.subr.mxu0 0.0
    %1707 = vmatpush1.msra.mxu0 0.0
    %1708 = vmatprep.subr.mxu0 0.0
    %1709 = vmatpush1.msra.mxu0 0.0
    %1710 = vmatprep.subr.mxu0 0.0
    %1711 = vmatpush1.msra.mxu0 0.0
    %v1712 = vand.u32 %v1491, 4294901760
    %v1713 = vsub.f32 %v1491, %v1712
    %1714 = vmatprep.subr.mxu0 %v1713
    %v1715 = vand.u32 %v1490, 4294901760
    %v1716 = vsub.f32 %v1490, %v1715
    %1717 = vmatpush1.msra.mxu0 %v1716
    %v1718 = vand.u32 %v1487, 4294901760
    %v1719 = vsub.f32 %v1487, %v1718
    %1720 = vmatprep.subr.mxu0 %v1719
    %v1721 = vand.u32 %v1486, 4294901760
    %v1722 = vsub.f32 %v1486, %v1721
    %1723 = vmatpush1.msra.mxu0 %v1722
    %1724 = vmatprep.subr.mxu0 0.0
    %1725 = vmatpush2.msra.mxu0 0.0
    %1726 = vmatprep.subr.mxu0 0.0
    %1727 = vmatpush2.msra.mxu0 0.0
    %1728 = vmatprep.subr.mxu0 0.0
    %1729 = vmatpush2.msra.mxu0 0.0
    %1730 = vmatprep.subr.mxu0 0.0
    %1731 = vmatpush2.msra.mxu0 0.0
    %1732 = vmatprep.subr.mxu0 0.0
    %1733 = vmatpush2.msra.mxu0 0.0
    %1734 = vmatprep.subr.mxu0 0.0
    %1735 = vmatpush2.msra.mxu0 0.0
    %1736 = vmatprep.subr.mxu0 0.0
    %1737 = vmatpush2.msra.mxu0 0.0
    %1738 = vmatprep.subr.mxu0 0.0
    %1739 = vmatpush2.msra.mxu0 0.0
    %1740 = vmatprep.subr.mxu0 0.0
    %1741 = vmatpush2.msra.mxu0 0.0
    %1742 = vmatprep.subr.mxu0 0.0
    %1743 = vmatpush2.msra.mxu0 0.0
    %1744 = vmatprep.subr.mxu0 0.0
    %1745 = vmatpush2.msra.mxu0 0.0
    %1746 = vmatprep.subr.mxu0 0.0
    %1747 = vmatpush2.msra.mxu0 0.0
    %1748 = vmatprep.subr.mxu0 0.0
    %1749 = vmatpush2.msra.mxu0 0.0
    %1750 = vmatprep.subr.mxu0 0.0
    %1751 = vmatpush2.msra.mxu0 0.0
    %1752 = vmatprep.subr.mxu0 0.0
    %1753 = vmatpush2.msra.mxu0 0.0
    %1754 = vmatprep.subr.mxu0 0.0
    %1755 = vmatpush2.msra.mxu0 0.0
    %1756 = vmatprep.mubr.f32.mxu0 0.0
    %v1757 = vand.u32 %v194, 4294901760
    %v1758 = vsub.f32 %v194, %v1757
    %1759 = vmatmul.mubr.f32.gmra.mxu0 %v1758
    %v1760 = vpop.f32.mrf.mxu0
    %v1761 = vadd.f32 %v1673, %v1760
    %v1762 = vpop.f32.mrf.mxu0
    %v1763 = vadd.f32 %v1675, %v1762
    %1764 = vmatprep.mubr.f32.mxu0 0.0
    %v1765 = vand.u32 %v197, 4294901760
    %v1766 = vsub.f32 %v197, %v1765
    %1767 = vmatmul.mubr.f32.gmra.mxu0 %v1766
    %v1768 = vpop.f32.mrf.mxu0
    %v1769 = vadd.f32 %v1680, %v1768
    %v1770 = vpop.f32.mrf.mxu0
    %v1771 = vadd.f32 %v1682, %v1770
    %1772 = vdwg.mxu0
    %1773 = vmatprep.subr.mxu0 0.0
    %1774 = vmatpush1.msra.mxu0 0.0
    %1775 = vmatprep.subr.mxu0 0.0
    %1776 = vmatpush1.msra.mxu0 0.0
    %1777 = vmatprep.subr.mxu0 0.0
    %1778 = vmatpush1.msra.mxu0 0.0
    %1779 = vmatprep.subr.mxu0 0.0
    %1780 = vmatpush1.msra.mxu0 0.0
    %1781 = vmatprep.subr.mxu0 0.0
    %1782 = vmatpush1.msra.mxu0 0.0
    %1783 = vmatprep.subr.mxu0 0.0
    %1784 = vmatpush1.msra.mxu0 0.0
    %1785 = vmatprep.subr.mxu0 0.0
    %1786 = vmatpush1.msra.mxu0 0.0
    %1787 = vmatprep.subr.mxu0 0.0
    %1788 = vmatpush1.msra.mxu0 0.0
    %1789 = vmatprep.subr.mxu0 0.0
    %1790 = vmatpush1.msra.mxu0 0.0
    %1791 = vmatprep.subr.mxu0 0.0
    %1792 = vmatpush1.msra.mxu0 0.0
    %1793 = vmatprep.subr.mxu0 0.0
    %1794 = vmatpush1.msra.mxu0 0.0
    %1795 = vmatprep.subr.mxu0 0.0
    %1796 = vmatpush1.msra.mxu0 0.0
    %1797 = vmatprep.subr.mxu0 0.0
    %1798 = vmatpush1.msra.mxu0 0.0
    %1799 = vmatprep.subr.mxu0 0.0
    %1800 = vmatpush1.msra.mxu0 0.0
    %v1801 = vand.u32 %v1491, 4294901760
    %1802 = vmatprep.subr.mxu0 %v1801
    %v1803 = vand.u32 %v1490, 4294901760
    %1804 = vmatpush1.msra.mxu0 %v1803
    %v1805 = vand.u32 %v1487, 4294901760
    %1806 = vmatprep.subr.mxu0 %v1805
    %v1807 = vand.u32 %v1486, 4294901760
    %1808 = vmatpush1.msra.mxu0 %v1807
    %1809 = vmatprep.subr.mxu0 0.0
    %1810 = vmatpush2.msra.mxu0 0.0
    %1811 = vmatprep.subr.mxu0 0.0
    %1812 = vmatpush2.msra.mxu0 0.0
    %1813 = vmatprep.subr.mxu0 0.0
    %1814 = vmatpush2.msra.mxu0 0.0
    %1815 = vmatprep.subr.mxu0 0.0
    %1816 = vmatpush2.msra.mxu0 0.0
    %1817 = vmatprep.subr.mxu0 0.0
    %1818 = vmatpush2.msra.mxu0 0.0
    %1819 = vmatprep.subr.mxu0 0.0
    %1820 = vmatpush2.msra.mxu0 0.0
    %1821 = vmatprep.subr.mxu0 0.0
    %1822 = vmatpush2.msra.mxu0 0.0
    %1823 = vmatprep.subr.mxu0 0.0
    %1824 = vmatpush2.msra.mxu0 0.0
    %1825 = vmatprep.subr.mxu0 0.0
    %1826 = vmatpush2.msra.mxu0 0.0
    %1827 = vmatprep.subr.mxu0 0.0
    %1828 = vmatpush2.msra.mxu0 0.0
    %1829 = vmatprep.subr.mxu0 0.0
    %1830 = vmatpush2.msra.mxu0 0.0
    %1831 = vmatprep.subr.mxu0 0.0
    %1832 = vmatpush2.msra.mxu0 0.0
    %1833 = vmatprep.subr.mxu0 0.0
    %1834 = vmatpush2.msra.mxu0 0.0
    %1835 = vmatprep.subr.mxu0 0.0
    %1836 = vmatpush2.msra.mxu0 0.0
    %1837 = vmatprep.subr.mxu0 0.0
    %1838 = vmatpush2.msra.mxu0 0.0
    %1839 = vmatprep.subr.mxu0 0.0
    %1840 = vmatpush2.msra.mxu0 0.0
    %1841 = vmatprep.mubr.f32.mxu0 0.0
    %v1842 = vand.u32 %v194, 4294901760
    %v1843 = vsub.f32 %v194, %v1842
    %v1844 = vand.u32 %v1843, 4294901760
    %1845 = vmatmul.mubr.f32.gmra.mxu0 %v1844
    %v1846 = vpop.f32.mrf.mxu0
    %v1847 = vadd.f32 %v1761, %v1846
    %v1848 = vpop.f32.mrf.mxu0
    %v1849 = vadd.f32 %v1763, %v1848
    %1850 = vmatprep.mubr.f32.mxu0 0.0
    %v1851 = vand.u32 %v197, 4294901760
    %v1852 = vsub.f32 %v197, %v1851
    %v1853 = vand.u32 %v1852, 4294901760
    %1854 = vmatmul.mubr.f32.gmra.mxu0 %v1853
    %v1855 = vpop.f32.mrf.mxu0
    %v1856 = vadd.f32 %v1769, %v1855
    %v1857 = vpop.f32.mrf.mxu0
    %v1858 = vadd.f32 %v1771, %v1857
    %1859 = vdwg.mxu0
    %1860 = vmatprep.subr.mxu0 0.0
    %1861 = vmatpush1.msra.mxu0 0.0
    %1862 = vmatprep.subr.mxu0 0.0
    %1863 = vmatpush1.msra.mxu0 0.0
    %1864 = vmatprep.subr.mxu0 0.0
    %1865 = vmatpush1.msra.mxu0 0.0
    %1866 = vmatprep.subr.mxu0 0.0
    %1867 = vmatpush1.msra.mxu0 0.0
    %1868 = vmatprep.subr.mxu0 0.0
    %1869 = vmatpush1.msra.mxu0 0.0
    %1870 = vmatprep.subr.mxu0 0.0
    %1871 = vmatpush1.msra.mxu0 0.0
    %1872 = vmatprep.subr.mxu0 0.0
    %1873 = vmatpush1.msra.mxu0 0.0
    %1874 = vmatprep.subr.mxu0 0.0
    %1875 = vmatpush1.msra.mxu0 0.0
    %1876 = vmatprep.subr.mxu0 0.0
    %1877 = vmatpush1.msra.mxu0 0.0
    %1878 = vmatprep.subr.mxu0 0.0
    %1879 = vmatpush1.msra.mxu0 0.0
    %1880 = vmatprep.subr.mxu0 0.0
    %1881 = vmatpush1.msra.mxu0 0.0
    %1882 = vmatprep.subr.mxu0 0.0
    %1883 = vmatpush1.msra.mxu0 0.0
    %1884 = vmatprep.subr.mxu0 0.0
    %1885 = vmatpush1.msra.mxu0 0.0
    %1886 = vmatprep.subr.mxu0 0.0
    %1887 = vmatpush1.msra.mxu0 0.0
    %v1888 = vand.u32 %v1491, 4294901760
    %v1889 = vsub.f32 %v1491, %v1888
    %v1890 = vand.u32 %v1889, 4294901760
    %1891 = vmatprep.subr.mxu0 %v1890
    %v1892 = vand.u32 %v1490, 4294901760
    %v1893 = vsub.f32 %v1490, %v1892
    %v1894 = vand.u32 %v1893, 4294901760
    %1895 = vmatpush1.msra.mxu0 %v1894
    %v1896 = vand.u32 %v1487, 4294901760
    %v1897 = vsub.f32 %v1487, %v1896
    %v1898 = vand.u32 %v1897, 4294901760
    %1899 = vmatprep.subr.mxu0 %v1898
    %v1900 = vand.u32 %v1486, 4294901760
    %v1901 = vsub.f32 %v1486, %v1900
    %v1902 = vand.u32 %v1901, 4294901760
    %1903 = vmatpush1.msra.mxu0 %v1902
    %1904 = vmatprep.subr.mxu0 0.0
    %1905 = vmatpush2.msra.mxu0 0.0
    %1906 = vmatprep.subr.mxu0 0.0
    %1907 = vmatpush2.msra.mxu0 0.0
    %1908 = vmatprep.subr.mxu0 0.0
    %1909 = vmatpush2.msra.mxu0 0.0
    %1910 = vmatprep.subr.mxu0 0.0
    %1911 = vmatpush2.msra.mxu0 0.0
    %1912 = vmatprep.subr.mxu0 0.0
    %1913 = vmatpush2.msra.mxu0 0.0
    %1914 = vmatprep.subr.mxu0 0.0
    %1915 = vmatpush2.msra.mxu0 0.0
    %1916 = vmatprep.subr.mxu0 0.0
    %1917 = vmatpush2.msra.mxu0 0.0
    %1918 = vmatprep.subr.mxu0 0.0
    %1919 = vmatpush2.msra.mxu0 0.0
    %1920 = vmatprep.subr.mxu0 0.0
    %1921 = vmatpush2.msra.mxu0 0.0
    %1922 = vmatprep.subr.mxu0 0.0
    %1923 = vmatpush2.msra.mxu0 0.0
    %1924 = vmatprep.subr.mxu0 0.0
    %1925 = vmatpush2.msra.mxu0 0.0
    %1926 = vmatprep.subr.mxu0 0.0
    %1927 = vmatpush2.msra.mxu0 0.0
    %1928 = vmatprep.subr.mxu0 0.0
    %1929 = vmatpush2.msra.mxu0 0.0
    %1930 = vmatprep.subr.mxu0 0.0
    %1931 = vmatpush2.msra.mxu0 0.0
    %1932 = vmatprep.subr.mxu0 0.0
    %1933 = vmatpush2.msra.mxu0 0.0
    %1934 = vmatprep.subr.mxu0 0.0
    %1935 = vmatpush2.msra.mxu0 0.0
    %1936 = vmatprep.mubr.f32.mxu0 0.0
    %v1937 = vand.u32 %v194, 4294901760
    %1938 = vmatmul.mubr.f32.gmra.mxu0 %v1937
    %v1939 = vpop.f32.mrf.mxu0
    %v1940 = vadd.f32 %v1847, %v1939
    %v1941 = vpop.f32.mrf.mxu0
    %v1942 = vadd.f32 %v1849, %v1941
    %1943 = vmatprep.mubr.f32.mxu0 0.0
    %v1944 = vand.u32 %v197, 4294901760
    %1945 = vmatmul.mubr.f32.gmra.mxu0 %v1944
    %v1946 = vpop.f32.mrf.mxu0
    %v1947 = vadd.f32 %v1856, %v1946
    %v1948 = vpop.f32.mrf.mxu0
    %v1949 = vadd.f32 %v1858, %v1948
    %1950 = vdwg.mxu0
    %1951 = vmatprep.subr.mxu0 0.0
    %1952 = vmatpush1.msra.mxu0 0.0
    %1953 = vmatprep.subr.mxu0 0.0
    %1954 = vmatpush1.msra.mxu0 0.0
    %1955 = vmatprep.subr.mxu0 0.0
    %1956 = vmatpush1.msra.mxu0 0.0
    %1957 = vmatprep.subr.mxu0 0.0
    %1958 = vmatpush1.msra.mxu0 0.0
    %1959 = vmatprep.subr.mxu0 0.0
    %1960 = vmatpush1.msra.mxu0 0.0
    %1961 = vmatprep.subr.mxu0 0.0
    %1962 = vmatpush1.msra.mxu0 0.0
    %1963 = vmatprep.subr.mxu0 0.0
    %1964 = vmatpush1.msra.mxu0 0.0
    %1965 = vmatprep.subr.mxu0 0.0
    %1966 = vmatpush1.msra.mxu0 0.0
    %1967 = vmatprep.subr.mxu0 0.0
    %1968 = vmatpush1.msra.mxu0 0.0
    %1969 = vmatprep.subr.mxu0 0.0
    %1970 = vmatpush1.msra.mxu0 0.0
    %1971 = vmatprep.subr.mxu0 0.0
    %1972 = vmatpush1.msra.mxu0 0.0
    %1973 = vmatprep.subr.mxu0 0.0
    %1974 = vmatpush1.msra.mxu0 0.0
    %1975 = vmatprep.subr.mxu0 0.0
    %1976 = vmatpush1.msra.mxu0 0.0
    %1977 = vmatprep.subr.mxu0 0.0
    %1978 = vmatpush1.msra.mxu0 0.0
    %v1979 = vand.u32 %v1491, 4294901760
    %1980 = vmatprep.subr.mxu0 %v1979
    %v1981 = vand.u32 %v1490, 4294901760
    %1982 = vmatpush1.msra.mxu0 %v1981
    %v1983 = vand.u32 %v1487, 4294901760
    %1984 = vmatprep.subr.mxu0 %v1983
    %v1985 = vand.u32 %v1486, 4294901760
    %1986 = vmatpush1.msra.mxu0 %v1985
    %1987 = vmatprep.subr.mxu0 0.0
    %1988 = vmatpush2.msra.mxu0 0.0
    %1989 = vmatprep.subr.mxu0 0.0
    %1990 = vmatpush2.msra.mxu0 0.0
    %1991 = vmatprep.subr.mxu0 0.0
    %1992 = vmatpush2.msra.mxu0 0.0
    %1993 = vmatprep.subr.mxu0 0.0
    %1994 = vmatpush2.msra.mxu0 0.0
    %1995 = vmatprep.subr.mxu0 0.0
    %1996 = vmatpush2.msra.mxu0 0.0
    %1997 = vmatprep.subr.mxu0 0.0
    %1998 = vmatpush2.msra.mxu0 0.0
    %1999 = vmatprep.subr.mxu0 0.0
    %2000 = vmatpush2.msra.mxu0 0.0
    %2001 = vmatprep.subr.mxu0 0.0
    %2002 = vmatpush2.msra.mxu0 0.0
    %2003 = vmatprep.subr.mxu0 0.0
    %2004 = vmatpush2.msra.mxu0 0.0
    %2005 = vmatprep.subr.mxu0 0.0
    %2006 = vmatpush2.msra.mxu0 0.0
    %2007 = vmatprep.subr.mxu0 0.0
    %2008 = vmatpush2.msra.mxu0 0.0
    %2009 = vmatprep.subr.mxu0 0.0
    %2010 = vmatpush2.msra.mxu0 0.0
    %2011 = vmatprep.subr.mxu0 0.0
    %2012 = vmatpush2.msra.mxu0 0.0
    %2013 = vmatprep.subr.mxu0 0.0
    %2014 = vmatpush2.msra.mxu0 0.0
    %2015 = vmatprep.subr.mxu0 0.0
    %2016 = vmatpush2.msra.mxu0 0.0
    %2017 = vmatprep.subr.mxu0 0.0
    %2018 = vmatpush2.msra.mxu0 0.0
    %2019 = vmatprep.mubr.f32.mxu0 0.0
    %v2020 = vand.u32 %v194, 4294901760
    %2021 = vmatmul.mubr.f32.gmra.mxu0 %v2020
    %v2022 = vpop.f32.mrf.mxu0
    %v2023 = vadd.f32 %v1940, %v2022
    %v2024 = vpop.f32.mrf.mxu0
    %v2025 = vadd.f32 %v1942, %v2024
    %2026 = vmatprep.mubr.f32.mxu0 0.0
    %v2027 = vand.u32 %v197, 4294901760
    %2028 = vmatmul.mubr.f32.gmra.mxu0 %v2027
    %v2029 = vpop.f32.mrf.mxu0
    %v2030 = vadd.f32 %v1947, %v2029
    %v2031 = vpop.f32.mrf.mxu0
    %v2032 = vadd.f32 %v1949, %v2031
    %2033 = vdwg.mxu0
    %2034 = vmatprep.subr.mxu0 0.0
    %2035 = vmatpush1.msra.mxu0 0.0
    %2036 = vmatprep.subr.mxu0 0.0
    %2037 = vmatpush1.msra.mxu0 0.0
    %2038 = vmatprep.subr.mxu0 0.0
    %2039 = vmatpush1.msra.mxu0 0.0
    %2040 = vmatprep.subr.mxu0 0.0
    %2041 = vmatpush1.msra.mxu0 0.0
    %2042 = vmatprep.subr.mxu0 0.0
    %2043 = vmatpush1.msra.mxu0 0.0
    %2044 = vmatprep.subr.mxu0 0.0
    %2045 = vmatpush1.msra.mxu0 0.0
    %2046 = vmatprep.subr.mxu0 0.0
    %2047 = vmatpush1.msra.mxu0 0.0
    %2048 = vmatprep.subr.mxu0 0.0
    %2049 = vmatpush1.msra.mxu0 0.0
    %2050 = vmatprep.subr.mxu0 0.0
    %2051 = vmatpush1.msra.mxu0 0.0
    %2052 = vmatprep.subr.mxu0 0.0
    %2053 = vmatpush1.msra.mxu0 0.0
    %2054 = vmatprep.subr.mxu0 0.0
    %2055 = vmatpush1.msra.mxu0 0.0
    %2056 = vmatprep.subr.mxu0 0.0
    %2057 = vmatpush1.msra.mxu0 0.0
    %2058 = vmatprep.subr.mxu0 0.0
    %2059 = vmatpush1.msra.mxu0 0.0
    %2060 = vmatprep.subr.mxu0 0.0
    %2061 = vmatpush1.msra.mxu0 0.0
    %v2062 = vand.u32 %v1493, 4294901760
    %2063 = vmatprep.subr.mxu0 %v2062
    %v2064 = vand.u32 %v1492, 4294901760
    %2065 = vmatpush1.msra.mxu0 %v2064
    %v2066 = vand.u32 %v1489, 4294901760
    %2067 = vmatprep.subr.mxu0 %v2066
    %v2068 = vand.u32 %v1488, 4294901760
    %2069 = vmatpush1.msra.mxu0 %v2068
    %2070 = vmatprep.subr.mxu0 0.0
    %2071 = vmatpush2.msra.mxu0 0.0
    %2072 = vmatprep.subr.mxu0 0.0
    %2073 = vmatpush2.msra.mxu0 0.0
    %2074 = vmatprep.subr.mxu0 0.0
    %2075 = vmatpush2.msra.mxu0 0.0
    %2076 = vmatprep.subr.mxu0 0.0
    %2077 = vmatpush2.msra.mxu0 0.0
    %2078 = vmatprep.subr.mxu0 0.0
    %2079 = vmatpush2.msra.mxu0 0.0
    %2080 = vmatprep.subr.mxu0 0.0
    %2081 = vmatpush2.msra.mxu0 0.0
    %2082 = vmatprep.subr.mxu0 0.0
    %2083 = vmatpush2.msra.mxu0 0.0
    %2084 = vmatprep.subr.mxu0 0.0
    %2085 = vmatpush2.msra.mxu0 0.0
    %2086 = vmatprep.subr.mxu0 0.0
    %2087 = vmatpush2.msra.mxu0 0.0
    %2088 = vmatprep.subr.mxu0 0.0
    %2089 = vmatpush2.msra.mxu0 0.0
    %2090 = vmatprep.subr.mxu0 0.0
    %2091 = vmatpush2.msra.mxu0 0.0
    %2092 = vmatprep.subr.mxu0 0.0
    %2093 = vmatpush2.msra.mxu0 0.0
    %2094 = vmatprep.subr.mxu0 0.0
    %2095 = vmatpush2.msra.mxu0 0.0
    %2096 = vmatprep.subr.mxu0 0.0
    %2097 = vmatpush2.msra.mxu0 0.0
    %2098 = vmatprep.subr.mxu0 0.0
    %2099 = vmatpush2.msra.mxu0 0.0
    %2100 = vmatprep.subr.mxu0 0.0
    %2101 = vmatpush2.msra.mxu0 0.0
    %2102 = vmatprep.mubr.f32.mxu0 0.0
    %v2103 = vand.u32 %v194, 4294901760
    %v2104 = vsub.f32 %v194, %v2103
    %v2105 = vand.u32 %v2104, 4294901760
    %v2106 = vsub.f32 %v2104, %v2105
    %v2107 = vand.u32 %v2106, 4294901760
    %2108 = vmatmul.mubr.f32.gmra.mxu0 %v2107
    %v2109 = vpop.f32.mrf.mxu0
    %v2110 = vadd.f32 %v185, %v2109
    %v2111 = vpop.f32.mrf.mxu0
    %v2112 = vadd.f32 %v185, %v2111
    %2113 = vmatprep.mubr.f32.mxu0 0.0
    %v2114 = vand.u32 %v197, 4294901760
    %v2115 = vsub.f32 %v197, %v2114
    %v2116 = vand.u32 %v2115, 4294901760
    %v2117 = vsub.f32 %v2115, %v2116
    %v2118 = vand.u32 %v2117, 4294901760
    %2119 = vmatmul.mubr.f32.gmra.mxu0 %v2118
    %v2120 = vpop.f32.mrf.mxu0
    %v2121 = vadd.f32 %v190, %v2120
    %v2122 = vpop.f32.mrf.mxu0
    %v2123 = vadd.f32 %v190, %v2122
    %2124 = vdwg.mxu0
    %2125 = vmatprep.subr.mxu0 0.0
    %2126 = vmatpush1.msra.mxu0 0.0
    %2127 = vmatprep.subr.mxu0 0.0
    %2128 = vmatpush1.msra.mxu0 0.0
    %2129 = vmatprep.subr.mxu0 0.0
    %2130 = vmatpush1.msra.mxu0 0.0
    %2131 = vmatprep.subr.mxu0 0.0
    %2132 = vmatpush1.msra.mxu0 0.0
    %2133 = vmatprep.subr.mxu0 0.0
    %2134 = vmatpush1.msra.mxu0 0.0
    %2135 = vmatprep.subr.mxu0 0.0
    %2136 = vmatpush1.msra.mxu0 0.0
    %2137 = vmatprep.subr.mxu0 0.0
    %2138 = vmatpush1.msra.mxu0 0.0
    %2139 = vmatprep.subr.mxu0 0.0
    %2140 = vmatpush1.msra.mxu0 0.0
    %2141 = vmatprep.subr.mxu0 0.0
    %2142 = vmatpush1.msra.mxu0 0.0
    %2143 = vmatprep.subr.mxu0 0.0
    %2144 = vmatpush1.msra.mxu0 0.0
    %2145 = vmatprep.subr.mxu0 0.0
    %2146 = vmatpush1.msra.mxu0 0.0
    %2147 = vmatprep.subr.mxu0 0.0
    %2148 = vmatpush1.msra.mxu0 0.0
    %2149 = vmatprep.subr.mxu0 0.0
    %2150 = vmatpush1.msra.mxu0 0.0
    %2151 = vmatprep.subr.mxu0 0.0
    %2152 = vmatpush1.msra.mxu0 0.0
    %v2153 = vand.u32 %v1493, 4294901760
    %v2154 = vsub.f32 %v1493, %v2153
    %v2155 = vand.u32 %v2154, 4294901760
    %v2156 = vsub.f32 %v2154, %v2155
    %v2157 = vand.u32 %v2156, 4294901760
    %2158 = vmatprep.subr.mxu0 %v2157
    %v2159 = vand.u32 %v1492, 4294901760
    %v2160 = vsub.f32 %v1492, %v2159
    %v2161 = vand.u32 %v2160, 4294901760
    %v2162 = vsub.f32 %v2160, %v2161
    %v2163 = vand.u32 %v2162, 4294901760
    %2164 = vmatpush1.msra.mxu0 %v2163
    %v2165 = vand.u32 %v1489, 4294901760
    %v2166 = vsub.f32 %v1489, %v2165
    %v2167 = vand.u32 %v2166, 4294901760
    %v2168 = vsub.f32 %v2166, %v2167
    %v2169 = vand.u32 %v2168, 4294901760
    %2170 = vmatprep.subr.mxu0 %v2169
    %v2171 = vand.u32 %v1488, 4294901760
    %v2172 = vsub.f32 %v1488, %v2171
    %v2173 = vand.u32 %v2172, 4294901760
    %v2174 = vsub.f32 %v2172, %v2173
    %v2175 = vand.u32 %v2174, 4294901760
    %2176 = vmatpush1.msra.mxu0 %v2175
    %2177 = vmatprep.subr.mxu0 0.0
    %2178 = vmatpush2.msra.mxu0 0.0
    %2179 = vmatprep.subr.mxu0 0.0
    %2180 = vmatpush2.msra.mxu0 0.0
    %2181 = vmatprep.subr.mxu0 0.0
    %2182 = vmatpush2.msra.mxu0 0.0
    %2183 = vmatprep.subr.mxu0 0.0
    %2184 = vmatpush2.msra.mxu0 0.0
    %2185 = vmatprep.subr.mxu0 0.0
    %2186 = vmatpush2.msra.mxu0 0.0
    %2187 = vmatprep.subr.mxu0 0.0
    %2188 = vmatpush2.msra.mxu0 0.0
    %2189 = vmatprep.subr.mxu0 0.0
    %2190 = vmatpush2.msra.mxu0 0.0
    %2191 = vmatprep.subr.mxu0 0.0
    %2192 = vmatpush2.msra.mxu0 0.0
    %2193 = vmatprep.subr.mxu0 0.0
    %2194 = vmatpush2.msra.mxu0 0.0
    %2195 = vmatprep.subr.mxu0 0.0
    %2196 = vmatpush2.msra.mxu0 0.0
    %2197 = vmatprep.subr.mxu0 0.0
    %2198 = vmatpush2.msra.mxu0 0.0
    %2199 = vmatprep.subr.mxu0 0.0
    %2200 = vmatpush2.msra.mxu0 0.0
    %2201 = vmatprep.subr.mxu0 0.0
    %2202 = vmatpush2.msra.mxu0 0.0
    %2203 = vmatprep.subr.mxu0 0.0
    %2204 = vmatpush2.msra.mxu0 0.0
    %2205 = vmatprep.subr.mxu0 0.0
    %2206 = vmatpush2.msra.mxu0 0.0
    %2207 = vmatprep.subr.mxu0 0.0
    %2208 = vmatpush2.msra.mxu0 0.0
    %2209 = vmatprep.mubr.f32.mxu0 0.0
    %v2210 = vand.u32 %v194, 4294901760
    %2211 = vmatmul.mubr.f32.gmra.mxu0 %v2210
    %v2212 = vpop.f32.mrf.mxu0
    %v2213 = vadd.f32 %v2110, %v2212
    %v2214 = vpop.f32.mrf.mxu0
    %v2215 = vadd.f32 %v2112, %v2214
    %2216 = vmatprep.mubr.f32.mxu0 0.0
    %v2217 = vand.u32 %v197, 4294901760
    %2218 = vmatmul.mubr.f32.gmra.mxu0 %v2217
    %v2219 = vpop.f32.mrf.mxu0
    %v2220 = vadd.f32 %v2121, %v2219
    %v2221 = vpop.f32.mrf.mxu0
    %v2222 = vadd.f32 %v2123, %v2221
    %2223 = vdwg.mxu0
    %2224 = vmatprep.subr.mxu0 0.0
    %2225 = vmatpush1.msra.mxu0 0.0
    %2226 = vmatprep.subr.mxu0 0.0
    %2227 = vmatpush1.msra.mxu0 0.0
    %2228 = vmatprep.subr.mxu0 0.0
    %2229 = vmatpush1.msra.mxu0 0.0
    %2230 = vmatprep.subr.mxu0 0.0
    %2231 = vmatpush1.msra.mxu0 0.0
    %2232 = vmatprep.subr.mxu0 0.0
    %2233 = vmatpush1.msra.mxu0 0.0
    %2234 = vmatprep.subr.mxu0 0.0
    %2235 = vmatpush1.msra.mxu0 0.0
    %2236 = vmatprep.subr.mxu0 0.0
    %2237 = vmatpush1.msra.mxu0 0.0
    %2238 = vmatprep.subr.mxu0 0.0
    %2239 = vmatpush1.msra.mxu0 0.0
    %2240 = vmatprep.subr.mxu0 0.0
    %2241 = vmatpush1.msra.mxu0 0.0
    %2242 = vmatprep.subr.mxu0 0.0
    %2243 = vmatpush1.msra.mxu0 0.0
    %2244 = vmatprep.subr.mxu0 0.0
    %2245 = vmatpush1.msra.mxu0 0.0
    %2246 = vmatprep.subr.mxu0 0.0
    %2247 = vmatpush1.msra.mxu0 0.0
    %2248 = vmatprep.subr.mxu0 0.0
    %2249 = vmatpush1.msra.mxu0 0.0
    %2250 = vmatprep.subr.mxu0 0.0
    %2251 = vmatpush1.msra.mxu0 0.0
    %v2252 = vand.u32 %v1493, 4294901760
    %v2253 = vsub.f32 %v1493, %v2252
    %2254 = vmatprep.subr.mxu0 %v2253
    %v2255 = vand.u32 %v1492, 4294901760
    %v2256 = vsub.f32 %v1492, %v2255
    %2257 = vmatpush1.msra.mxu0 %v2256
    %v2258 = vand.u32 %v1489, 4294901760
    %v2259 = vsub.f32 %v1489, %v2258
    %2260 = vmatprep.subr.mxu0 %v2259
    %v2261 = vand.u32 %v1488, 4294901760
    %v2262 = vsub.f32 %v1488, %v2261
    %2263 = vmatpush1.msra.mxu0 %v2262
    %2264 = vmatprep.subr.mxu0 0.0
    %2265 = vmatpush2.msra.mxu0 0.0
    %2266 = vmatprep.subr.mxu0 0.0
    %2267 = vmatpush2.msra.mxu0 0.0
    %2268 = vmatprep.subr.mxu0 0.0
    %2269 = vmatpush2.msra.mxu0 0.0
    %2270 = vmatprep.subr.mxu0 0.0
    %2271 = vmatpush2.msra.mxu0 0.0
    %2272 = vmatprep.subr.mxu0 0.0
    %2273 = vmatpush2.msra.mxu0 0.0
    %2274 = vmatprep.subr.mxu0 0.0
    %2275 = vmatpush2.msra.mxu0 0.0
    %2276 = vmatprep.subr.mxu0 0.0
    %2277 = vmatpush2.msra.mxu0 0.0
    %2278 = vmatprep.subr.mxu0 0.0
    %2279 = vmatpush2.msra.mxu0 0.0
    %2280 = vmatprep.subr.mxu0 0.0
    %2281 = vmatpush2.msra.mxu0 0.0
    %2282 = vmatprep.subr.mxu0 0.0
    %2283 = vmatpush2.msra.mxu0 0.0
    %2284 = vmatprep.subr.mxu0 0.0
    %2285 = vmatpush2.msra.mxu0 0.0
    %2286 = vmatprep.subr.mxu0 0.0
    %2287 = vmatpush2.msra.mxu0 0.0
    %2288 = vmatprep.subr.mxu0 0.0
    %2289 = vmatpush2.msra.mxu0 0.0
    %2290 = vmatprep.subr.mxu0 0.0
    %2291 = vmatpush2.msra.mxu0 0.0
    %2292 = vmatprep.subr.mxu0 0.0
    %2293 = vmatpush2.msra.mxu0 0.0
    %2294 = vmatprep.subr.mxu0 0.0
    %2295 = vmatpush2.msra.mxu0 0.0
    %2296 = vmatprep.mubr.f32.mxu0 0.0
    %v2297 = vand.u32 %v194, 4294901760
    %v2298 = vsub.f32 %v194, %v2297
    %2299 = vmatmul.mubr.f32.gmra.mxu0 %v2298
    %v2300 = vpop.f32.mrf.mxu0
    %v2301 = vadd.f32 %v2213, %v2300
    %v2302 = vpop.f32.mrf.mxu0
    %v2303 = vadd.f32 %v2215, %v2302
    %2304 = vmatprep.mubr.f32.mxu0 0.0
    %v2305 = vand.u32 %v197, 4294901760
    %v2306 = vsub.f32 %v197, %v2305
    %2307 = vmatmul.mubr.f32.gmra.mxu0 %v2306
    %v2308 = vpop.f32.mrf.mxu0
    %v2309 = vadd.f32 %v2220, %v2308
    %v2310 = vpop.f32.mrf.mxu0
    %v2311 = vadd.f32 %v2222, %v2310
    %2312 = vdwg.mxu0
    %2313 = vmatprep.subr.mxu0 0.0
    %2314 = vmatpush1.msra.mxu0 0.0
    %2315 = vmatprep.subr.mxu0 0.0
    %2316 = vmatpush1.msra.mxu0 0.0
    %2317 = vmatprep.subr.mxu0 0.0
    %2318 = vmatpush1.msra.mxu0 0.0
    %2319 = vmatprep.subr.mxu0 0.0
    %2320 = vmatpush1.msra.mxu0 0.0
    %2321 = vmatprep.subr.mxu0 0.0
    %2322 = vmatpush1.msra.mxu0 0.0
    %2323 = vmatprep.subr.mxu0 0.0
    %2324 = vmatpush1.msra.mxu0 0.0
    %2325 = vmatprep.subr.mxu0 0.0
    %2326 = vmatpush1.msra.mxu0 0.0
    %2327 = vmatprep.subr.mxu0 0.0
    %2328 = vmatpush1.msra.mxu0 0.0
    %2329 = vmatprep.subr.mxu0 0.0
    %2330 = vmatpush1.msra.mxu0 0.0
    %2331 = vmatprep.subr.mxu0 0.0
    %2332 = vmatpush1.msra.mxu0 0.0
    %2333 = vmatprep.subr.mxu0 0.0
    %2334 = vmatpush1.msra.mxu0 0.0
    %2335 = vmatprep.subr.mxu0 0.0
    %2336 = vmatpush1.msra.mxu0 0.0
    %2337 = vmatprep.subr.mxu0 0.0
    %2338 = vmatpush1.msra.mxu0 0.0
    %2339 = vmatprep.subr.mxu0 0.0
    %2340 = vmatpush1.msra.mxu0 0.0
    %v2341 = vand.u32 %v1493, 4294901760
    %2342 = vmatprep.subr.mxu0 %v2341
    %v2343 = vand.u32 %v1492, 4294901760
    %2344 = vmatpush1.msra.mxu0 %v2343
    %v2345 = vand.u32 %v1489, 4294901760
    %2346 = vmatprep.subr.mxu0 %v2345
    %v2347 = vand.u32 %v1488, 4294901760
    %2348 = vmatpush1.msra.mxu0 %v2347
    %2349 = vmatprep.subr.mxu0 0.0
    %2350 = vmatpush2.msra.mxu0 0.0
    %2351 = vmatprep.subr.mxu0 0.0
    %2352 = vmatpush2.msra.mxu0 0.0
    %2353 = vmatprep.subr.mxu0 0.0
    %2354 = vmatpush2.msra.mxu0 0.0
    %2355 = vmatprep.subr.mxu0 0.0
    %2356 = vmatpush2.msra.mxu0 0.0
    %2357 = vmatprep.subr.mxu0 0.0
    %2358 = vmatpush2.msra.mxu0 0.0
    %2359 = vmatprep.subr.mxu0 0.0
    %2360 = vmatpush2.msra.mxu0 0.0
    %2361 = vmatprep.subr.mxu0 0.0
    %2362 = vmatpush2.msra.mxu0 0.0
    %2363 = vmatprep.subr.mxu0 0.0
    %2364 = vmatpush2.msra.mxu0 0.0
    %2365 = vmatprep.subr.mxu0 0.0
    %2366 = vmatpush2.msra.mxu0 0.0
    %2367 = vmatprep.subr.mxu0 0.0
    %2368 = vmatpush2.msra.mxu0 0.0
    %2369 = vmatprep.subr.mxu0 0.0
    %2370 = vmatpush2.msra.mxu0 0.0
    %2371 = vmatprep.subr.mxu0 0.0
    %2372 = vmatpush2.msra.mxu0 0.0
    %2373 = vmatprep.subr.mxu0 0.0
    %2374 = vmatpush2.msra.mxu0 0.0
    %2375 = vmatprep.subr.mxu0 0.0
    %2376 = vmatpush2.msra.mxu0 0.0
    %2377 = vmatprep.subr.mxu0 0.0
    %2378 = vmatpush2.msra.mxu0 0.0
    %2379 = vmatprep.subr.mxu0 0.0
    %2380 = vmatpush2.msra.mxu0 0.0
    %2381 = vmatprep.mubr.f32.mxu0 0.0
    %v2382 = vand.u32 %v194, 4294901760
    %v2383 = vsub.f32 %v194, %v2382
    %v2384 = vand.u32 %v2383, 4294901760
    %2385 = vmatmul.mubr.f32.gmra.mxu0 %v2384
    %v2386 = vpop.f32.mrf.mxu0
    %v2387 = vadd.f32 %v2301, %v2386
    %v2388 = vpop.f32.mrf.mxu0
    %v2389 = vadd.f32 %v2303, %v2388
    %2390 = vmatprep.mubr.f32.mxu0 0.0
    %v2391 = vand.u32 %v197, 4294901760
    %v2392 = vsub.f32 %v197, %v2391
    %v2393 = vand.u32 %v2392, 4294901760
    %2394 = vmatmul.mubr.f32.gmra.mxu0 %v2393
    %v2395 = vpop.f32.mrf.mxu0
    %v2396 = vadd.f32 %v2309, %v2395
    %v2397 = vpop.f32.mrf.mxu0
    %v2398 = vadd.f32 %v2311, %v2397
    %2399 = vdwg.mxu0
    %2400 = vmatprep.subr.mxu0 0.0
    %2401 = vmatpush1.msra.mxu0 0.0
    %2402 = vmatprep.subr.mxu0 0.0
    %2403 = vmatpush1.msra.mxu0 0.0
    %2404 = vmatprep.subr.mxu0 0.0
    %2405 = vmatpush1.msra.mxu0 0.0
    %2406 = vmatprep.subr.mxu0 0.0
    %2407 = vmatpush1.msra.mxu0 0.0
    %2408 = vmatprep.subr.mxu0 0.0
    %2409 = vmatpush1.msra.mxu0 0.0
    %2410 = vmatprep.subr.mxu0 0.0
    %2411 = vmatpush1.msra.mxu0 0.0
    %2412 = vmatprep.subr.mxu0 0.0
    %2413 = vmatpush1.msra.mxu0 0.0
    %2414 = vmatprep.subr.mxu0 0.0
    %2415 = vmatpush1.msra.mxu0 0.0
    %2416 = vmatprep.subr.mxu0 0.0
    %2417 = vmatpush1.msra.mxu0 0.0
    %2418 = vmatprep.subr.mxu0 0.0
    %2419 = vmatpush1.msra.mxu0 0.0
    %2420 = vmatprep.subr.mxu0 0.0
    %2421 = vmatpush1.msra.mxu0 0.0
    %2422 = vmatprep.subr.mxu0 0.0
    %2423 = vmatpush1.msra.mxu0 0.0
    %2424 = vmatprep.subr.mxu0 0.0
    %2425 = vmatpush1.msra.mxu0 0.0
    %2426 = vmatprep.subr.mxu0 0.0
    %2427 = vmatpush1.msra.mxu0 0.0
    %v2428 = vand.u32 %v1493, 4294901760
    %v2429 = vsub.f32 %v1493, %v2428
    %v2430 = vand.u32 %v2429, 4294901760
    %2431 = vmatprep.subr.mxu0 %v2430
    %v2432 = vand.u32 %v1492, 4294901760
    %v2433 = vsub.f32 %v1492, %v2432
    %v2434 = vand.u32 %v2433, 4294901760
    %2435 = vmatpush1.msra.mxu0 %v2434
    %v2436 = vand.u32 %v1489, 4294901760
    %v2437 = vsub.f32 %v1489, %v2436
    %v2438 = vand.u32 %v2437, 4294901760
    %2439 = vmatprep.subr.mxu0 %v2438
    %v2440 = vand.u32 %v1488, 4294901760
    %v2441 = vsub.f32 %v1488, %v2440
    %v2442 = vand.u32 %v2441, 4294901760
    %2443 = vmatpush1.msra.mxu0 %v2442
    %2444 = vmatprep.subr.mxu0 0.0
    %2445 = vmatpush2.msra.mxu0 0.0
    %2446 = vmatprep.subr.mxu0 0.0
    %2447 = vmatpush2.msra.mxu0 0.0
    %2448 = vmatprep.subr.mxu0 0.0
    %2449 = vmatpush2.msra.mxu0 0.0
    %2450 = vmatprep.subr.mxu0 0.0
    %2451 = vmatpush2.msra.mxu0 0.0
    %2452 = vmatprep.subr.mxu0 0.0
    %2453 = vmatpush2.msra.mxu0 0.0
    %2454 = vmatprep.subr.mxu0 0.0
    %2455 = vmatpush2.msra.mxu0 0.0
    %2456 = vmatprep.subr.mxu0 0.0
    %2457 = vmatpush2.msra.mxu0 0.0
    %2458 = vmatprep.subr.mxu0 0.0
    %2459 = vmatpush2.msra.mxu0 0.0
    %2460 = vmatprep.subr.mxu0 0.0
    %2461 = vmatpush2.msra.mxu0 0.0
    %2462 = vmatprep.subr.mxu0 0.0
    %2463 = vmatpush2.msra.mxu0 0.0
    %2464 = vmatprep.subr.mxu0 0.0
    %2465 = vmatpush2.msra.mxu0 0.0
    %2466 = vmatprep.subr.mxu0 0.0
    %2467 = vmatpush2.msra.mxu0 0.0
    %2468 = vmatprep.subr.mxu0 0.0
    %2469 = vmatpush2.msra.mxu0 0.0
    %2470 = vmatprep.subr.mxu0 0.0
    %2471 = vmatpush2.msra.mxu0 0.0
    %2472 = vmatprep.subr.mxu0 0.0
    %2473 = vmatpush2.msra.mxu0 0.0
    %2474 = vmatprep.subr.mxu0 0.0
    %2475 = vmatpush2.msra.mxu0 0.0
    %2476 = vmatprep.mubr.f32.mxu0 0.0
    %v2477 = vand.u32 %v194, 4294901760
    %2478 = vmatmul.mubr.f32.gmra.mxu0 %v2477
    %v2479 = vpop.f32.mrf.mxu0
    %v2480 = vadd.f32 %v2387, %v2479
    %v2481 = vpop.f32.mrf.mxu0
    %v2482 = vadd.f32 %v2389, %v2481
    %2483 = vmatprep.mubr.f32.mxu0 0.0
    %v2484 = vand.u32 %v197, 4294901760
    %2485 = vmatmul.mubr.f32.gmra.mxu0 %v2484
    %v2486 = vpop.f32.mrf.mxu0
    %v2487 = vadd.f32 %v2396, %v2486
    %v2488 = vpop.f32.mrf.mxu0
    %v2489 = vadd.f32 %v2398, %v2488
    %2490 = vdwg.mxu0
    %2491 = vmatprep.subr.mxu0 0.0
    %2492 = vmatpush1.msra.mxu0 0.0
    %2493 = vmatprep.subr.mxu0 0.0
    %2494 = vmatpush1.msra.mxu0 0.0
    %2495 = vmatprep.subr.mxu0 0.0
    %2496 = vmatpush1.msra.mxu0 0.0
    %2497 = vmatprep.subr.mxu0 0.0
    %2498 = vmatpush1.msra.mxu0 0.0
    %2499 = vmatprep.subr.mxu0 0.0
    %2500 = vmatpush1.msra.mxu0 0.0
    %2501 = vmatprep.subr.mxu0 0.0
    %2502 = vmatpush1.msra.mxu0 0.0
    %2503 = vmatprep.subr.mxu0 0.0
    %2504 = vmatpush1.msra.mxu0 0.0
    %2505 = vmatprep.subr.mxu0 0.0
    %2506 = vmatpush1.msra.mxu0 0.0
    %2507 = vmatprep.subr.mxu0 0.0
    %2508 = vmatpush1.msra.mxu0 0.0
    %2509 = vmatprep.subr.mxu0 0.0
    %2510 = vmatpush1.msra.mxu0 0.0
    %2511 = vmatprep.subr.mxu0 0.0
    %2512 = vmatpush1.msra.mxu0 0.0
    %2513 = vmatprep.subr.mxu0 0.0
    %2514 = vmatpush1.msra.mxu0 0.0
    %2515 = vmatprep.subr.mxu0 0.0
    %2516 = vmatpush1.msra.mxu0 0.0
    %2517 = vmatprep.subr.mxu0 0.0
    %2518 = vmatpush1.msra.mxu0 0.0
    %v2519 = vand.u32 %v1493, 4294901760
    %2520 = vmatprep.subr.mxu0 %v2519
    %v2521 = vand.u32 %v1492, 4294901760
    %2522 = vmatpush1.msra.mxu0 %v2521
    %v2523 = vand.u32 %v1489, 4294901760
    %2524 = vmatprep.subr.mxu0 %v2523
    %v2525 = vand.u32 %v1488, 4294901760
    %2526 = vmatpush1.msra.mxu0 %v2525
    %2527 = vmatprep.subr.mxu0 0.0
    %2528 = vmatpush2.msra.mxu0 0.0
    %2529 = vmatprep.subr.mxu0 0.0
    %2530 = vmatpush2.msra.mxu0 0.0
    %2531 = vmatprep.subr.mxu0 0.0
    %2532 = vmatpush2.msra.mxu0 0.0
    %2533 = vmatprep.subr.mxu0 0.0
    %2534 = vmatpush2.msra.mxu0 0.0
    %2535 = vmatprep.subr.mxu0 0.0
    %2536 = vmatpush2.msra.mxu0 0.0
    %2537 = vmatprep.subr.mxu0 0.0
    %2538 = vmatpush2.msra.mxu0 0.0
    %2539 = vmatprep.subr.mxu0 0.0
    %2540 = vmatpush2.msra.mxu0 0.0
    %2541 = vmatprep.subr.mxu0 0.0
    %2542 = vmatpush2.msra.mxu0 0.0
    %2543 = vmatprep.subr.mxu0 0.0
    %2544 = vmatpush2.msra.mxu0 0.0
    %2545 = vmatprep.subr.mxu0 0.0
    %2546 = vmatpush2.msra.mxu0 0.0
    %2547 = vmatprep.subr.mxu0 0.0
    %2548 = vmatpush2.msra.mxu0 0.0
    %2549 = vmatprep.subr.mxu0 0.0
    %2550 = vmatpush2.msra.mxu0 0.0
    %2551 = vmatprep.subr.mxu0 0.0
    %2552 = vmatpush2.msra.mxu0 0.0
    %2553 = vmatprep.subr.mxu0 0.0
    %2554 = vmatpush2.msra.mxu0 0.0
    %2555 = vmatprep.subr.mxu0 0.0
    %2556 = vmatpush2.msra.mxu0 0.0
    %2557 = vmatprep.subr.mxu0 0.0
    %2558 = vmatpush2.msra.mxu0 0.0
    %2559 = vmatprep.mubr.f32.mxu0 0.0
    %v2560 = vand.u32 %v194, 4294901760
    %2561 = vmatmul.mubr.f32.gmra.mxu0 %v2560
    %v2562 = vpop.f32.mrf.mxu0
    %v2563 = vadd.f32 %v2480, %v2562
    %v2564 = vpop.f32.mrf.mxu0
    %v2565 = vadd.f32 %v2482, %v2564
    %2566 = vmatprep.mubr.f32.mxu0 0.0
    %v2567 = vand.u32 %v197, 4294901760
    %2568 = vmatmul.mubr.f32.gmra.mxu0 %v2567
    %v2569 = vpop.f32.mrf.mxu0
    %v2570 = vadd.f32 %v2487, %v2569
    %v2571 = vpop.f32.mrf.mxu0
    %v2572 = vadd.f32 %v2489, %v2571
    %2573 = vdwg.mxu0
    %v2574 = vmax.f32 %v2023, 0.0
    %v2575 = vmax.f32 %v2025, 0.0
    %v2576 = vmax.f32 %v2563, 0.0
    %v2577 = vmax.f32 %v2565, 0.0
    %v2578 = vmax.f32 %v2030, 0.0
    %v2579 = vmax.f32 %v2032, 0.0
    %v2580 = vmax.f32 %v2570, 0.0
    %v2581 = vmax.f32 %v2572, 0.0
    %v2582 = vmul.f32 %v1290, %v2574
    %v2583 = vmul.f32 %v1290, %v2575
    %v2584 = vmul.f32 %v1290, %v2576
    %v2585 = vmul.f32 %v1290, %v2577
    %v2586 = vmul.f32 %v1295, %v2578
    %v2587 = vmul.f32 %v1295, %v2579
    %v2588 = vmul.f32 %v1295, %v2580
    %v2589 = vmul.f32 %v1295, %v2581
    %v2590 = vadd.f32 %v2582, %v2586
    %v2591 = vrot.slane %v2590, 4
    %v2592 = vadd.f32 %v2590, %v2591
    %v2593 = vrot.slane %v2592, 2
    %v2594 = vadd.f32 %v2592, %v2593
    %v2595 = vrot.slane %v2594, 1
    %v2596 = vadd.f32 %v2594, %v2595
    %v2597 = vadd.f32 %v2583, %v2587
    %v2598 = vrot.slane %v2597, 4
    %v2599 = vadd.f32 %v2597, %v2598
    %v2600 = vrot.slane %v2599, 2
    %v2601 = vadd.f32 %v2599, %v2600
    %v2602 = vrot.slane %v2601, 1
    %v2603 = vadd.f32 %v2601, %v2602
    %v2604 = vadd.f32 %v2584, %v2588
    %v2605 = vrot.slane %v2604, 4
    %v2606 = vadd.f32 %v2604, %v2605
    %v2607 = vrot.slane %v2606, 2
    %v2608 = vadd.f32 %v2606, %v2607
    %v2609 = vrot.slane %v2608, 1
    %v2610 = vadd.f32 %v2608, %v2609
    %v2611 = vadd.f32 %v2585, %v2589
    %v2612 = vrot.slane %v2611, 4
    %v2613 = vadd.f32 %v2611, %v2612
    %v2614 = vrot.slane %v2613, 2
    %v2615 = vadd.f32 %v2613, %v2614
    %v2616 = vrot.slane %v2615, 1
    %v2617 = vadd.f32 %v2615, %v2616
    %v2618 = vadd.f32 %v2596, %v1341
    %v2619 = vadd.f32 %v2603, %v1341
    %v2620 = vadd.f32 %v2610, %v1341
    %v2621 = vadd.f32 %v2617, %v1341
    %v2626 = vcombine.low %v2618, %v2619
    %v2627 = vcombine.low %v2620, %v2621
    %v2629 = vunpack.c.l.s4 1966171168
    %v2630 = vunpack.c.0.s8 %v2629
    %v2631 = vlaneseq
    %v2632 = vshrl.u32 %v2631, 7
    %v2633 = vsub.s32 %v2630, %v2632
    %v2634 = vrot.slane %v2626, %v2633
    %v2636 = vunpack.c.l.s4 1966171168
    %v2637 = vunpack.c.0.s8 %v2636
    %v2638 = vlaneseq
    %v2639 = vshrl.u32 %v2638, 7
    %v2640 = vsub.s32 %v2637, %v2639
    %v2641 = vrot.slane %v2627, %v2640
    %v2642 = vcombine.low %v2634, %v2641
    %v2644 = vunpack.c.l.s4 1966171168
    %v2645 = vunpack.c.0.s8 %v2644
    %v2646 = vlaneseq
    %v2647 = vshrl.u32 %v2646, 7
    %v2648 = vsub.s32 %v2645, %v2647
    %v2649 = vrot.slane %v2642, %v2648
    %2651 = vst.msk [vmem:[#allocation3 + $0x4] sm:$0xf] %vm1378, %v2649
    // Predicated region
    $region30: #{tpu_custom_call.1} parent=1 // pred_check
      _
    $region31: #{tpu_custom_call.1} parent=1 // pred_check_branch
      %2653 = sbr.rel (0) target = $region33
    $region32: #{tpu_custom_call.1} parent=1 // pred_region
      %s2655 = ssub.s32 128, 128
      %2656 = vsyncadd [#allocation4], %s2655
      %s2658 = sshll.u32 [#allocation3], 4
      %s2659 = int_to_ptr.vmem [resolvable:$true] %s2658
      %2661 = dma.vmem_to_hbm [thread:$0]  %s2659, 128, %s7, [#allocation4]
    $region33: #{tpu_custom_call.1} parent=1 // pred_fallthru
      _
    // Predicated region
    $region34: #{tpu_custom_call.1} parent=1 // pred_check
      _
    $region35: #{tpu_custom_call.1} parent=1 // pred_check_branch
      %2663 = sbr.rel (0) target = $region37
    $region36: #{tpu_custom_call.1} parent=1 // pred_region
      %2664 = dma.done [#allocation4], 128
    $region37: #{tpu_custom_call.1} parent=1 // pred_fallthru
      _
    %2665 = vsyncpa [#allocation4], 1

</llo_original>
